<compile_context>
chip_gen: v6e
topology: v6e:2x2x1
jax: 0.10.0
libtpu: 0.0.40
codegen_flags: <defaults>
</compile_context>

<pallas_src>
import functools

import jax
import jax.numpy as jnp
from jax import lax
from jax.experimental import pallas as pl
from jax.experimental.pallas import tpu as pltpu

DEQ_EXPAND = 5
NUM_GROUPS = 4
EPS = 1e-5


def _round_up(n, m):
    return ((n + m - 1) // m) * m


def _group_norm_cf(x, gamma, beta, gmat, inv_count):
    """GroupNorm on a channels-first (C, HW) slab for a single sample.

    Lane-reduce first ((C,HW) -> (C,1) sums), then combine channels of the
    same group via a tiny (C,C)@(C,1) matmul.  One-pass biased variance,
    eps=1e-5, per-channel affine -> matches nn.GroupNorm.
    gamma/beta: (C,1); gmat: (C,C) same-group indicator (padded rows zero).
    """
    s1 = jnp.sum(x, axis=-1, keepdims=True)              # (C, 1)
    s2 = jnp.sum(x * x, axis=-1, keepdims=True)          # (C, 1)
    mean = jnp.dot(gmat, s1, preferred_element_type=jnp.float32) * inv_count
    ex2 = jnp.dot(gmat, s2, preferred_element_type=jnp.float32) * inv_count
    var = ex2 - mean * mean
    return (x - mean) * (lax.rsqrt(var + EPS) * gamma) + beta


def _basic_block_kernel(H, W, cpg_mid, cpg_out, has_inj, *refs):
    if has_inj:
        (x_ref, inj_ref, w1_ref, w2_ref, g1_ref, b1_ref, g2_ref, b2_ref,
         g3_ref, b3_ref, gm_mid_ref, gm_out_ref, mask_ref, out_ref) = refs
    else:
        (x_ref, w1_ref, w2_ref, g1_ref, b1_ref, g2_ref, b2_ref,
         g3_ref, b3_ref, gm_mid_ref, gm_out_ref, mask_ref, out_ref) = refs
        inj_ref = None

    HW = H * W
    inv_mid = 1.0 / (cpg_mid * HW)       # uses REAL channels-per-group
    inv_out = 1.0 / (cpg_out * HW)

    masks = mask_ref[...]                                 # (9, HW) 0/1 f32

    def conv3x3(x_cf, w_mat):
        """x_cf: (Cin_p, HW), w_mat: (Cout_p, 9*Cin_p) -> (Cout_p, HW) f32."""
        taps = []
        t = 0
        for dy in (-1, 0, 1):
            for dx in (-1, 0, 1):
                off = dy * W + dx
                if off == 0:
                    taps.append(x_cf)                     # center tap, no mask
                else:
                    shifted = pltpu.roll(x_cf, shift=(-off) % HW, axis=1)
                    taps.append(shifted * masks[t:t + 1])
                t += 1
        patches = jnp.concatenate(taps, axis=0)           # (9*Cin_p, HW)
        return jnp.dot(w_mat, patches, preferred_element_type=jnp.float32)

    x = x_ref[0]                                          # (Cin_p, HW)

    # conv1 -> gn1 -> relu
    out1 = conv3x3(x, w1_ref[...])                        # (Cmid_p, HW)
    out1 = _group_norm_cf(out1, g1_ref[...], b1_ref[...],
                          gm_mid_ref[...], inv_mid)
    out1 = jnp.maximum(out1, 0.0)

    # conv2 (+ injection) -> gn2
    out2 = conv3x3(out1, w2_ref[...])                     # (planes_p, HW)
    if has_inj:
        out2 = out2 + inj_ref[0]
    out2 = _group_norm_cf(out2, g2_ref[...], b2_ref[...],
                          gm_out_ref[...], inv_out)

    # residual add (downsample=None), relu3, gn3
    out2 = jnp.maximum(out2 + x, 0.0)
    out2 = _group_norm_cf(out2, g3_ref[...], b3_ref[...],
                          gm_out_ref[...], inv_out)

    out_ref[0] = out2


# ------------------------------ host-side prep ------------------------------
def _pack_conv_weight(w, cin_p, cout_p):
    """(Cout, Cin, 3, 3) -> (cout_p, 9*cin_p), column order (tap, cin)."""
    cout, cin, kh, kw = w.shape
    wt = jnp.transpose(w, (0, 2, 3, 1))                   # (Cout, ky, kx, Cin)
    wt = jnp.pad(wt, ((0, cout_p - cout), (0, 0), (0, 0), (0, cin_p - cin)))
    return wt.reshape(cout_p, kh * kw * cin_p).astype(jnp.float32)


def _pad_vec(v, c_p):
    return jnp.pad(v.astype(jnp.float32), (0, c_p - v.shape[0])).reshape(c_p, 1)


def _same_group_matrix(C, C_p):
    """(C_p, C_p) indicator of 'same original GN group'; padded rows/cols 0."""
    gid = jnp.arange(C_p) // (C // NUM_GROUPS)
    valid = jnp.arange(C_p) < C
    m = (gid[:, None] == gid[None, :]) & valid[:, None] & valid[None, :]
    return m.astype(jnp.float32)


def _tap_masks(H, W):
    """(9, HW) 0/1 f32 boundary masks for the 3x3 taps (tap = (dy+1)*3+dx+1)."""
    HW = H * W
    idx = jnp.arange(HW)
    row, col = idx // W, idx % W
    rows = []
    for dy in (-1, 0, 1):
        for dx in (-1, 0, 1):
            rows.append((row + dy >= 0) & (row + dy < H) &
                        (col + dx >= 0) & (col + dx < W))
    return jnp.stack(rows).astype(jnp.float32)


def basic_block(x_nchw, inj_nchw, params):
    """x_nchw: (B, Cin, H, W); inj_nchw: (B, planes, H, W) or None -> NCHW."""
    w1, w2, g1, b1, g2, b2, g3, b3 = params               # PyTorch shapes
    B, Cin, H, W = x_nchw.shape
    Cmid = w1.shape[0]
    planes = w2.shape[0]
    HW = H * W
    assert Cin == planes, "residual add requires inplanes == planes"
    assert Cmid % NUM_GROUPS == 0 and planes % NUM_GROUPS == 0

    cin_p = _round_up(Cin, 8)
    cmid_p = _round_up(Cmid, 8)
    pln_p = _round_up(planes, 8)
    has_inj = inj_nchw is not None

    w1_mat = _pack_conv_weight(w1, cin_p, cmid_p)          # (cmid_p, 9*cin_p)
    w2_mat = _pack_conv_weight(w2, cmid_p, pln_p)          # (pln_p, 9*cmid_p)

    x_cf = jnp.pad(x_nchw.astype(jnp.float32),
                   ((0, 0), (0, cin_p - Cin), (0, 0), (0, 0))
                   ).reshape(B, cin_p, HW)

    g1c, b1c = _pad_vec(g1, cmid_p), _pad_vec(b1, cmid_p)
    g2c, b2c = _pad_vec(g2, pln_p), _pad_vec(b2, pln_p)
    g3c, b3c = _pad_vec(g3, pln_p), _pad_vec(b3, pln_p)

    gm_mid = _same_group_matrix(Cmid, cmid_p)
    gm_out = _same_group_matrix(planes, pln_p)
    masks = _tap_masks(H, W)

    kernel = functools.partial(_basic_block_kernel, H, W,
                               Cmid // NUM_GROUPS, planes // NUM_GROUPS,
                               has_inj)

    const = lambda b: (0, 0)
    in_specs = [pl.BlockSpec((1, cin_p, HW), lambda b: (b, 0, 0))]      # x
    inputs = [x_cf]
    if has_inj:
        inj_cf = jnp.pad(inj_nchw.astype(jnp.float32),
                         ((0, 0), (0, pln_p - planes), (0, 0), (0, 0))
                         ).reshape(B, pln_p, HW)
        in_specs.append(pl.BlockSpec((1, pln_p, HW), lambda b: (b, 0, 0)))
        inputs.append(inj_cf)
    in_specs += [
        pl.BlockSpec((cmid_p, 9 * cin_p), const),          # w1
        pl.BlockSpec((pln_p, 9 * cmid_p), const),          # w2
        pl.BlockSpec((cmid_p, 1), const),                  # g1
        pl.BlockSpec((cmid_p, 1), const),                  # b1
        pl.BlockSpec((pln_p, 1), const),                   # g2
        pl.BlockSpec((pln_p, 1), const),                   # b2
        pl.BlockSpec((pln_p, 1), const),                   # g3
        pl.BlockSpec((pln_p, 1), const),                   # b3
        pl.BlockSpec((cmid_p, cmid_p), const),             # gm_mid
        pl.BlockSpec((pln_p, pln_p), const),               # gm_out
        pl.BlockSpec((9, HW), const),                      # tap masks
    ]
    inputs += [w1_mat, w2_mat, g1c, b1c, g2c, b2c, g3c, b3c,
               gm_mid, gm_out, masks]

    out_cf = pl.pallas_call(
        kernel,
        out_shape=jax.ShapeDtypeStruct((B, pln_p, HW), jnp.float32),
        grid_spec=pltpu.PrefetchScalarGridSpec(
            num_scalar_prefetch=0,
            grid=(B,),
            in_specs=in_specs,
            out_specs=pl.BlockSpec((1, pln_p, HW), lambda b: (b, 0, 0)),
        ),
        compiler_params=pltpu.CompilerParams(
            dimension_semantics=("parallel",)),
    )(*inputs)

    return out_cf[:, :planes, :].reshape(B, planes, H, W)


# ---------------------------- pure-JAX reference ----------------------------
def _gn_ref(x, gamma, beta):
    B, C, H, W = x.shape
    cpg = C // NUM_GROUPS
    xr = x.reshape(B, NUM_GROUPS, cpg, H, W)
    mean = xr.mean(axis=(2, 3, 4), keepdims=True)
    var = xr.var(axis=(2, 3, 4), keepdims=True)
    xn = ((xr - mean) / jnp.sqrt(var + EPS)).reshape(B, C, H, W)
    return xn * gamma.reshape(1, C, 1, 1) + beta.reshape(1, C, 1, 1)


def _conv_ref(x, w):
    return lax.conv_general_dilated(
        x, w, window_strides=(1, 1), padding=((1, 1), (1, 1)),
        dimension_numbers=("NCHW", "OIHW", "NCHW"))


def basic_block_ref(x, inj, params):
    w1, w2, g1, b1, g2, b2, g3, b3 = params
    out = _conv_ref(x, w1)
    out = _gn_ref(out, g1, b1)
    out = jnp.maximum(out, 0.0)
    out = _conv_ref(out, w2)
    if inj is not None:
        out = out + inj
    out = _gn_ref(out, g2, b2)
    out = out + x
    out = jnp.maximum(out, 0.0)
    return _gn_ref(out, g3, b3)


# ----------------------------------- main -----------------------------------
if __name__ == "__main__":
    B, inplanes, H, W = 2, 4, 16, 16                 # NCHW like the PyTorch module
    planes = inplanes                                # downsample=None
    Cmid = DEQ_EXPAND * planes                       # 20

    key = jax.random.PRNGKey(0)
    ks = jax.random.split(key, 10)

    # deterministic synthetic parameters in PyTorch shapes
    w1 = (0.1 * jax.random.normal(ks[0], (Cmid, inplanes, 3, 3))).astype(jnp.float32)
    w2 = (0.1 * jax.random.normal(ks[1], (planes, Cmid, 3, 3))).astype(jnp.float32)
    g1 = (1.0 + 0.1 * jax.random.normal(ks[2], (Cmid,))).astype(jnp.float32)
    b1 = (0.1 * jax.random.normal(ks[3], (Cmid,))).astype(jnp.float32)
    g2 = (1.0 + 0.1 * jax.random.normal(ks[4], (planes,))).astype(jnp.float32)
    b2 = (0.1 * jax.random.normal(ks[5], (planes,))).astype(jnp.float32)
    g3 = (1.0 + 0.1 * jax.random.normal(ks[6], (planes,))).astype(jnp.float32)
    b3 = (0.1 * jax.random.normal(ks[7], (planes,))).astype(jnp.float32)
    params = (w1, w2, g1, b1, g2, b2, g3, b3)

    x = jax.random.normal(ks[8], (B, inplanes, H, W), jnp.float32)

    # injection=None path (the module's default forward(x)) is specialized.
    out = basic_block(x, None, params)
    out = jax.block_until_ready(out)

    ref = basic_block_ref(x, None, params)
    err = float(jnp.max(jnp.abs(out - ref)))
    assert err < 1e-3, f"mismatch vs reference: max abs err = {err}"

    print("KERNEL_OK")
</pallas_src>

<mosaic_0001>
module attributes {stable_mosaic.version = 11 : i64} {
  func.func @_basic_block_kernel(%arg0: i32, %arg1: memref<1x8x256xf32, #tpu.memory_space<vmem>>, %arg2: memref<24x72xf32, #tpu.memory_space<vmem>>, %arg3: memref<8x216xf32, #tpu.memory_space<vmem>>, %arg4: memref<24x1xf32, #tpu.memory_space<vmem>>, %arg5: memref<24x1xf32, #tpu.memory_space<vmem>>, %arg6: memref<8x1xf32, #tpu.memory_space<vmem>>, %arg7: memref<8x1xf32, #tpu.memory_space<vmem>>, %arg8: memref<8x1xf32, #tpu.memory_space<vmem>>, %arg9: memref<8x1xf32, #tpu.memory_space<vmem>>, %arg10: memref<24x24xf32, #tpu.memory_space<vmem>>, %arg11: memref<8x8xf32, #tpu.memory_space<vmem>>, %arg12: memref<9x256xf32, #tpu.memory_space<vmem>>, %arg13: memref<1x8x256xf32, #tpu.memory_space<vmem>>) attributes {dimension_semantics = [#tpu.dimension_semantics<parallel>], iteration_bounds = array<i64: 2>, scalar_prefetch = 0 : i64, scratch_operands = 0 : i64, tpu.core_type = #tpu.core_type<tc>, window_params = [{transform_indices = @transform_0, window_bounds = array<i64: 1, 8, 256>}, {pipeline_mode = #tpu.pipeline_mode<synchronous>, transform_indices = @transform_1, window_bounds = array<i64: 24, 72>}, {pipeline_mode = #tpu.pipeline_mode<synchronous>, transform_indices = @transform_2, window_bounds = array<i64: 8, 216>}, {pipeline_mode = #tpu.pipeline_mode<synchronous>, transform_indices = @transform_3, window_bounds = array<i64: 24, 1>}, {pipeline_mode = #tpu.pipeline_mode<synchronous>, transform_indices = @transform_4, window_bounds = array<i64: 24, 1>}, {pipeline_mode = #tpu.pipeline_mode<synchronous>, transform_indices = @transform_5, window_bounds = array<i64: 8, 1>}, {pipeline_mode = #tpu.pipeline_mode<synchronous>, transform_indices = @transform_6, window_bounds = array<i64: 8, 1>}, {pipeline_mode = #tpu.pipeline_mode<synchronous>, transform_indices = @transform_7, window_bounds = array<i64: 8, 1>}, {pipeline_mode = #tpu.pipeline_mode<synchronous>, transform_indices = @transform_8, window_bounds = array<i64: 8, 1>}, {pipeline_mode = #tpu.pipeline_mode<synchronous>, transform_indices = @transform_9, window_bounds = array<i64: 24, 24>}, {pipeline_mode = #tpu.pipeline_mode<synchronous>, transform_indices = @transform_10, window_bounds = array<i64: 8, 8>}, {pipeline_mode = #tpu.pipeline_mode<synchronous>, transform_indices = @transform_11, window_bounds = array<i64: 9, 256>}, {transform_indices = @transform_12, window_bounds = array<i64: 1, 8, 256>}]} {
    %c0 = arith.constant 0 : index
    %c0_0 = arith.constant 0 : index
    %0 = vector.load %arg12[%c0, %c0_0] : memref<9x256xf32, #tpu.memory_space<vmem>>, vector<9x256xf32>
    %c0_1 = arith.constant 0 : index
    %c0_2 = arith.constant 0 : index
    %c0_3 = arith.constant 0 : index
    %1 = vector.load %arg1[%c0_1, %c0_2, %c0_3] : memref<1x8x256xf32, #tpu.memory_space<vmem>>, vector<1x8x256xf32>
    %2 = vector.shape_cast %1 : vector<1x8x256xf32> to vector<8x256xf32>
    %c0_4 = arith.constant 0 : index
    %c0_5 = arith.constant 0 : index
    %3 = vector.load %arg2[%c0_4, %c0_5] : memref<24x72xf32, #tpu.memory_space<vmem>>, vector<24x72xf32>
    %c17_i32 = arith.constant 17 : i32
    %4 = tpu.dynamic_rotate %2 by %c17_i32 dim 1 : vector<8x256xf32>, i32 -> vector<8x256xf32>
    %5 = vector.extract_strided_slice %0 {offsets = [0, 0], sizes = [1, 256], strides = [1, 1]} : vector<9x256xf32> to vector<1x256xf32>
    %6 = vector.broadcast %5 : vector<1x256xf32> to vector<8x256xf32>
    %7 = arith.mulf %4, %6 : vector<8x256xf32>
    %c16_i32 = arith.constant 16 : i32
    %8 = tpu.dynamic_rotate %2 by %c16_i32 dim 1 : vector<8x256xf32>, i32 -> vector<8x256xf32>
    %9 = vector.extract_strided_slice %0 {offsets = [1, 0], sizes = [1, 256], strides = [1, 1]} : vector<9x256xf32> to vector<1x256xf32>
    %10 = vector.broadcast %9 : vector<1x256xf32> to vector<8x256xf32>
    %11 = arith.mulf %8, %10 : vector<8x256xf32>
    %c15_i32 = arith.constant 15 : i32
    %12 = tpu.dynamic_rotate %2 by %c15_i32 dim 1 : vector<8x256xf32>, i32 -> vector<8x256xf32>
    %13 = vector.extract_strided_slice %0 {offsets = [2, 0], sizes = [1, 256], strides = [1, 1]} : vector<9x256xf32> to vector<1x256xf32>
    %14 = vector.broadcast %13 : vector<1x256xf32> to vector<8x256xf32>
    %15 = arith.mulf %12, %14 : vector<8x256xf32>
    %c1_i32 = arith.constant 1 : i32
    %16 = tpu.dynamic_rotate %2 by %c1_i32 dim 1 : vector<8x256xf32>, i32 -> vector<8x256xf32>
    %17 = vector.extract_strided_slice %0 {offsets = [3, 0], sizes = [1, 256], strides = [1, 1]} : vector<9x256xf32> to vector<1x256xf32>
    %18 = vector.broadcast %17 : vector<1x256xf32> to vector<8x256xf32>
    %19 = arith.mulf %16, %18 : vector<8x256xf32>
    %c255_i32 = arith.constant 255 : i32
    %20 = tpu.dynamic_rotate %2 by %c255_i32 dim 1 : vector<8x256xf32>, i32 -> vector<8x256xf32>
    %21 = vector.extract_strided_slice %0 {offsets = [5, 0], sizes = [1, 256], strides = [1, 1]} : vector<9x256xf32> to vector<1x256xf32>
    %22 = vector.broadcast %21 : vector<1x256xf32> to vector<8x256xf32>
    %23 = arith.mulf %20, %22 : vector<8x256xf32>
    %c241_i32 = arith.constant 241 : i32
    %24 = tpu.dynamic_rotate %2 by %c241_i32 dim 1 : vector<8x256xf32>, i32 -> vector<8x256xf32>
    %25 = vector.extract_strided_slice %0 {offsets = [6, 0], sizes = [1, 256], strides = [1, 1]} : vector<9x256xf32> to vector<1x256xf32>
    %26 = vector.broadcast %25 : vector<1x256xf32> to vector<8x256xf32>
    %27 = arith.mulf %24, %26 : vector<8x256xf32>
    %c240_i32 = arith.constant 240 : i32
    %28 = tpu.dynamic_rotate %2 by %c240_i32 dim 1 : vector<8x256xf32>, i32 -> vector<8x256xf32>
    %29 = vector.extract_strided_slice %0 {offsets = [7, 0], sizes = [1, 256], strides = [1, 1]} : vector<9x256xf32> to vector<1x256xf32>
    %30 = vector.broadcast %29 : vector<1x256xf32> to vector<8x256xf32>
    %31 = arith.mulf %28, %30 : vector<8x256xf32>
    %c239_i32 = arith.constant 239 : i32
    %32 = tpu.dynamic_rotate %2 by %c239_i32 dim 1 : vector<8x256xf32>, i32 -> vector<8x256xf32>
    %33 = vector.extract_strided_slice %0 {offsets = [8, 0], sizes = [1, 256], strides = [1, 1]} : vector<9x256xf32> to vector<1x256xf32>
    %34 = vector.broadcast %33 : vector<1x256xf32> to vector<8x256xf32>
    %35 = arith.mulf %32, %34 : vector<8x256xf32>
    %36 = tpu.concatenate %7, %11, %15, %19, %2, %23, %27, %31, %35 in 0 : vector<8x256xf32>, vector<8x256xf32>, vector<8x256xf32>, vector<8x256xf32>, vector<8x256xf32>, vector<8x256xf32>, vector<8x256xf32>, vector<8x256xf32>, vector<8x256xf32> -> vector<72x256xf32>
    %cst = arith.constant dense<0.000000e+00> : vector<24x256xf32>
    %37 = tpu.matmul %3, %36, %cst {dimension_numbers = #tpu.dot_dimension_numbers<[1], [0], [0], [1], [0, 0, 1, 1], [], []>} : vector<24x72xf32>, vector<72x256xf32>, vector<24x256xf32> -> vector<24x256xf32>
    %c0_6 = arith.constant 0 : index
    %c0_7 = arith.constant 0 : index
    %38 = vector.load %arg4[%c0_6, %c0_7] : memref<24x1xf32, #tpu.memory_space<vmem>>, vector<24x1xf32>
    %c0_8 = arith.constant 0 : index
    %c0_9 = arith.constant 0 : index
    %39 = vector.load %arg5[%c0_8, %c0_9] : memref<24x1xf32, #tpu.memory_space<vmem>>, vector<24x1xf32>
    %c0_10 = arith.constant 0 : index
    %c0_11 = arith.constant 0 : index
    %40 = vector.load %arg10[%c0_10, %c0_11] : memref<24x24xf32, #tpu.memory_space<vmem>>, vector<24x24xf32>
    %cst_12 = arith.constant dense<0.000000e+00> : vector<24xf32>
    %41 = vector.multi_reduction <add>, %37, %cst_12 [1] : vector<24x256xf32> to vector<24xf32>
    %42 = vector.shape_cast %41 : vector<24xf32> to vector<24x1xf32>
    %43 = arith.mulf %37, %37 : vector<24x256xf32>
    %cst_13 = arith.constant dense<0.000000e+00> : vector<24xf32>
    %44 = vector.multi_reduction <add>, %43, %cst_13 [1] : vector<24x256xf32> to vector<24xf32>
    %45 = vector.shape_cast %44 : vector<24xf32> to vector<24x1xf32>
    %cst_14 = arith.constant dense<0.000000e+00> : vector<24x1xf32>
    %46 = tpu.matmul %40, %42, %cst_14 {dimension_numbers = #tpu.dot_dimension_numbers<[1], [0], [0], [1], [0, 0, 1, 1], [], []>} : vector<24x24xf32>, vector<24x1xf32>, vector<24x1xf32> -> vector<24x1xf32>
    %cst_15 = arith.constant 7.812500e-04 : f32
    %47 = vector.broadcast %cst_15 : f32 to vector<24x1xf32>
    %48 = arith.mulf %46, %47 : vector<24x1xf32>
    %cst_16 = arith.constant dense<0.000000e+00> : vector<24x1xf32>
    %49 = tpu.matmul %40, %45, %cst_16 {dimension_numbers = #tpu.dot_dimension_numbers<[1], [0], [0], [1], [0, 0, 1, 1], [], []>} : vector<24x24xf32>, vector<24x1xf32>, vector<24x1xf32> -> vector<24x1xf32>
    %cst_17 = arith.constant 7.812500e-04 : f32
    %50 = vector.broadcast %cst_17 : f32 to vector<24x1xf32>
    %51 = arith.mulf %49, %50 : vector<24x1xf32>
    %52 = arith.mulf %48, %48 : vector<24x1xf32>
    %53 = arith.subf %51, %52 : vector<24x1xf32>
    %54 = vector.broadcast %48 : vector<24x1xf32> to vector<24x256xf32>
    %55 = arith.subf %37, %54 : vector<24x256xf32>
    %cst_18 = arith.constant 9.99999974E-6 : f32
    %56 = vector.broadcast %cst_18 : f32 to vector<24x1xf32>
    %57 = arith.addf %53, %56 : vector<24x1xf32>
    %58 = math.rsqrt %57 : vector<24x1xf32>
    %59 = arith.mulf %58, %38 : vector<24x1xf32>
    %60 = vector.broadcast %59 : vector<24x1xf32> to vector<24x256xf32>
    %61 = arith.mulf %55, %60 : vector<24x256xf32>
    %62 = vector.broadcast %39 : vector<24x1xf32> to vector<24x256xf32>
    %63 = arith.addf %61, %62 : vector<24x256xf32>
    %cst_19 = arith.constant 0.000000e+00 : f32
    %64 = vector.broadcast %cst_19 : f32 to vector<24x256xf32>
    %65 = arith.maximumf %63, %64 : vector<24x256xf32>
    %c0_20 = arith.constant 0 : index
    %c0_21 = arith.constant 0 : index
    %66 = vector.load %arg3[%c0_20, %c0_21] : memref<8x216xf32, #tpu.memory_space<vmem>>, vector<8x216xf32>
    %c17_i32_22 = arith.constant 17 : i32
    %67 = tpu.dynamic_rotate %65 by %c17_i32_22 dim 1 : vector<24x256xf32>, i32 -> vector<24x256xf32>
    %68 = vector.extract_strided_slice %0 {offsets = [0, 0], sizes = [1, 256], strides = [1, 1]} : vector<9x256xf32> to vector<1x256xf32>
    %69 = vector.broadcast %68 : vector<1x256xf32> to vector<24x256xf32>
    %70 = arith.mulf %67, %69 : vector<24x256xf32>
    %c16_i32_23 = arith.constant 16 : i32
    %71 = tpu.dynamic_rotate %65 by %c16_i32_23 dim 1 : vector<24x256xf32>, i32 -> vector<24x256xf32>
    %72 = vector.extract_strided_slice %0 {offsets = [1, 0], sizes = [1, 256], strides = [1, 1]} : vector<9x256xf32> to vector<1x256xf32>
    %73 = vector.broadcast %72 : vector<1x256xf32> to vector<24x256xf32>
    %74 = arith.mulf %71, %73 : vector<24x256xf32>
    %c15_i32_24 = arith.constant 15 : i32
    %75 = tpu.dynamic_rotate %65 by %c15_i32_24 dim 1 : vector<24x256xf32>, i32 -> vector<24x256xf32>
    %76 = vector.extract_strided_slice %0 {offsets = [2, 0], sizes = [1, 256], strides = [1, 1]} : vector<9x256xf32> to vector<1x256xf32>
    %77 = vector.broadcast %76 : vector<1x256xf32> to vector<24x256xf32>
    %78 = arith.mulf %75, %77 : vector<24x256xf32>
    %c1_i32_25 = arith.constant 1 : i32
    %79 = tpu.dynamic_rotate %65 by %c1_i32_25 dim 1 : vector<24x256xf32>, i32 -> vector<24x256xf32>
    %80 = vector.extract_strided_slice %0 {offsets = [3, 0], sizes = [1, 256], strides = [1, 1]} : vector<9x256xf32> to vector<1x256xf32>
    %81 = vector.broadcast %80 : vector<1x256xf32> to vector<24x256xf32>
    %82 = arith.mulf %79, %81 : vector<24x256xf32>
    %c255_i32_26 = arith.constant 255 : i32
    %83 = tpu.dynamic_rotate %65 by %c255_i32_26 dim 1 : vector<24x256xf32>, i32 -> vector<24x256xf32>
    %84 = vector.extract_strided_slice %0 {offsets = [5, 0], sizes = [1, 256], strides = [1, 1]} : vector<9x256xf32> to vector<1x256xf32>
    %85 = vector.broadcast %84 : vector<1x256xf32> to vector<24x256xf32>
    %86 = arith.mulf %83, %85 : vector<24x256xf32>
    %c241_i32_27 = arith.constant 241 : i32
    %87 = tpu.dynamic_rotate %65 by %c241_i32_27 dim 1 : vector<24x256xf32>, i32 -> vector<24x256xf32>
    %88 = vector.extract_strided_slice %0 {offsets = [6, 0], sizes = [1, 256], strides = [1, 1]} : vector<9x256xf32> to vector<1x256xf32>
    %89 = vector.broadcast %88 : vector<1x256xf32> to vector<24x256xf32>
    %90 = arith.mulf %87, %89 : vector<24x256xf32>
    %c240_i32_28 = arith.constant 240 : i32
    %91 = tpu.dynamic_rotate %65 by %c240_i32_28 dim 1 : vector<24x256xf32>, i32 -> vector<24x256xf32>
    %92 = vector.extract_strided_slice %0 {offsets = [7, 0], sizes = [1, 256], strides = [1, 1]} : vector<9x256xf32> to vector<1x256xf32>
    %93 = vector.broadcast %92 : vector<1x256xf32> to vector<24x256xf32>
    %94 = arith.mulf %91, %93 : vector<24x256xf32>
    %c239_i32_29 = arith.constant 239 : i32
    %95 = tpu.dynamic_rotate %65 by %c239_i32_29 dim 1 : vector<24x256xf32>, i32 -> vector<24x256xf32>
    %96 = vector.extract_strided_slice %0 {offsets = [8, 0], sizes = [1, 256], strides = [1, 1]} : vector<9x256xf32> to vector<1x256xf32>
    %97 = vector.broadcast %96 : vector<1x256xf32> to vector<24x256xf32>
    %98 = arith.mulf %95, %97 : vector<24x256xf32>
    %99 = tpu.concatenate %70, %74, %78, %82, %65, %86, %90, %94, %98 in 0 : vector<24x256xf32>, vector<24x256xf32>, vector<24x256xf32>, vector<24x256xf32>, vector<24x256xf32>, vector<24x256xf32>, vector<24x256xf32>, vector<24x256xf32>, vector<24x256xf32> -> vector<216x256xf32>
    %cst_30 = arith.constant dense<0.000000e+00> : vector<8x256xf32>
    %100 = tpu.matmul %66, %99, %cst_30 {dimension_numbers = #tpu.dot_dimension_numbers<[1], [0], [0], [1], [0, 0, 1, 1], [], []>} : vector<8x216xf32>, vector<216x256xf32>, vector<8x256xf32> -> vector<8x256xf32>
    %c0_31 = arith.constant 0 : index
    %c0_32 = arith.constant 0 : index
    %101 = vector.load %arg6[%c0_31, %c0_32] : memref<8x1xf32, #tpu.memory_space<vmem>>, vector<8x1xf32>
    %c0_33 = arith.constant 0 : index
    %c0_34 = arith.constant 0 : index
    %102 = vector.load %arg7[%c0_33, %c0_34] : memref<8x1xf32, #tpu.memory_space<vmem>>, vector<8x1xf32>
    %c0_35 = arith.constant 0 : index
    %c0_36 = arith.constant 0 : index
    %103 = vector.load %arg11[%c0_35, %c0_36] : memref<8x8xf32, #tpu.memory_space<vmem>>, vector<8x8xf32>
    %cst_37 = arith.constant dense<0.000000e+00> : vector<8xf32>
    %104 = vector.multi_reduction <add>, %100, %cst_37 [1] : vector<8x256xf32> to vector<8xf32>
    %105 = vector.shape_cast %104 : vector<8xf32> to vector<8x1xf32>
    %106 = arith.mulf %100, %100 : vector<8x256xf32>
    %cst_38 = arith.constant dense<0.000000e+00> : vector<8xf32>
    %107 = vector.multi_reduction <add>, %106, %cst_38 [1] : vector<8x256xf32> to vector<8xf32>
    %108 = vector.shape_cast %107 : vector<8xf32> to vector<8x1xf32>
    %cst_39 = arith.constant dense<0.000000e+00> : vector<8x1xf32>
    %109 = tpu.matmul %103, %105, %cst_39 {dimension_numbers = #tpu.dot_dimension_numbers<[1], [0], [0], [1], [0, 0, 1, 1], [], []>} : vector<8x8xf32>, vector<8x1xf32>, vector<8x1xf32> -> vector<8x1xf32>
    %cst_40 = arith.constant 3.906250e-03 : f32
    %110 = vector.broadcast %cst_40 : f32 to vector<8x1xf32>
    %111 = arith.mulf %109, %110 : vector<8x1xf32>
    %cst_41 = arith.constant dense<0.000000e+00> : vector<8x1xf32>
    %112 = tpu.matmul %103, %108, %cst_41 {dimension_numbers = #tpu.dot_dimension_numbers<[1], [0], [0], [1], [0, 0, 1, 1], [], []>} : vector<8x8xf32>, vector<8x1xf32>, vector<8x1xf32> -> vector<8x1xf32>
    %cst_42 = arith.constant 3.906250e-03 : f32
    %113 = vector.broadcast %cst_42 : f32 to vector<8x1xf32>
    %114 = arith.mulf %112, %113 : vector<8x1xf32>
    %115 = arith.mulf %111, %111 : vector<8x1xf32>
    %116 = arith.subf %114, %115 : vector<8x1xf32>
    %117 = vector.broadcast %111 : vector<8x1xf32> to vector<8x256xf32>
    %118 = arith.subf %100, %117 : vector<8x256xf32>
    %cst_43 = arith.constant 9.99999974E-6 : f32
    %119 = vector.broadcast %cst_43 : f32 to vector<8x1xf32>
    %120 = arith.addf %116, %119 : vector<8x1xf32>
    %121 = math.rsqrt %120 : vector<8x1xf32>
    %122 = arith.mulf %121, %101 : vector<8x1xf32>
    %123 = vector.broadcast %122 : vector<8x1xf32> to vector<8x256xf32>
    %124 = arith.mulf %118, %123 : vector<8x256xf32>
    %125 = vector.broadcast %102 : vector<8x1xf32> to vector<8x256xf32>
    %126 = arith.addf %124, %125 : vector<8x256xf32>
    %127 = arith.addf %126, %2 : vector<8x256xf32>
    %cst_44 = arith.constant 0.000000e+00 : f32
    %128 = vector.broadcast %cst_44 : f32 to vector<8x256xf32>
    %129 = arith.maximumf %127, %128 : vector<8x256xf32>
    %c0_45 = arith.constant 0 : index
    %c0_46 = arith.constant 0 : index
    %130 = vector.load %arg8[%c0_45, %c0_46] : memref<8x1xf32, #tpu.memory_space<vmem>>, vector<8x1xf32>
    %c0_47 = arith.constant 0 : index
    %c0_48 = arith.constant 0 : index
    %131 = vector.load %arg9[%c0_47, %c0_48] : memref<8x1xf32, #tpu.memory_space<vmem>>, vector<8x1xf32>
    %c0_49 = arith.constant 0 : index
    %c0_50 = arith.constant 0 : index
    %132 = vector.load %arg11[%c0_49, %c0_50] : memref<8x8xf32, #tpu.memory_space<vmem>>, vector<8x8xf32>
    %cst_51 = arith.constant dense<0.000000e+00> : vector<8xf32>
    %133 = vector.multi_reduction <add>, %129, %cst_51 [1] : vector<8x256xf32> to vector<8xf32>
    %134 = vector.shape_cast %133 : vector<8xf32> to vector<8x1xf32>
    %135 = arith.mulf %129, %129 : vector<8x256xf32>
    %cst_52 = arith.constant dense<0.000000e+00> : vector<8xf32>
    %136 = vector.multi_reduction <add>, %135, %cst_52 [1] : vector<8x256xf32> to vector<8xf32>
    %137 = vector.shape_cast %136 : vector<8xf32> to vector<8x1xf32>
    %cst_53 = arith.constant dense<0.000000e+00> : vector<8x1xf32>
    %138 = tpu.matmul %132, %134, %cst_53 {dimension_numbers = #tpu.dot_dimension_numbers<[1], [0], [0], [1], [0, 0, 1, 1], [], []>} : vector<8x8xf32>, vector<8x1xf32>, vector<8x1xf32> -> vector<8x1xf32>
    %cst_54 = arith.constant 3.906250e-03 : f32
    %139 = vector.broadcast %cst_54 : f32 to vector<8x1xf32>
    %140 = arith.mulf %138, %139 : vector<8x1xf32>
    %cst_55 = arith.constant dense<0.000000e+00> : vector<8x1xf32>
    %141 = tpu.matmul %132, %137, %cst_55 {dimension_numbers = #tpu.dot_dimension_numbers<[1], [0], [0], [1], [0, 0, 1, 1], [], []>} : vector<8x8xf32>, vector<8x1xf32>, vector<8x1xf32> -> vector<8x1xf32>
    %cst_56 = arith.constant 3.906250e-03 : f32
    %142 = vector.broadcast %cst_56 : f32 to vector<8x1xf32>
    %143 = arith.mulf %141, %142 : vector<8x1xf32>
    %144 = arith.mulf %140, %140 : vector<8x1xf32>
    %145 = arith.subf %143, %144 : vector<8x1xf32>
    %146 = vector.broadcast %140 : vector<8x1xf32> to vector<8x256xf32>
    %147 = arith.subf %129, %146 : vector<8x256xf32>
    %cst_57 = arith.constant 9.99999974E-6 : f32
    %148 = vector.broadcast %cst_57 : f32 to vector<8x1xf32>
    %149 = arith.addf %145, %148 : vector<8x1xf32>
    %150 = math.rsqrt %149 : vector<8x1xf32>
    %151 = arith.mulf %150, %130 : vector<8x1xf32>
    %152 = vector.broadcast %151 : vector<8x1xf32> to vector<8x256xf32>
    %153 = arith.mulf %147, %152 : vector<8x256xf32>
    %154 = vector.broadcast %131 : vector<8x1xf32> to vector<8x256xf32>
    %155 = arith.addf %153, %154 : vector<8x256xf32>
    %c0_58 = arith.constant 0 : index
    %c0_59 = arith.constant 0 : index
    %c0_60 = arith.constant 0 : index
    %156 = vector.load %arg13[%c0_58, %c0_59, %c0_60] : memref<1x8x256xf32, #tpu.memory_space<vmem>>, vector<1x8x256xf32>
    %157 = vector.shape_cast %156 : vector<1x8x256xf32> to vector<8x256xf32>
    %158 = vector.shape_cast %155 : vector<8x256xf32> to vector<1x8x256xf32>
    tpu.vector_store %arg13[%c0_58, %c0_59, %c0_60], %158 {strides = array<i32>} : memref<1x8x256xf32, #tpu.memory_space<vmem>>, vector<1x8x256xf32>,
    return
  }
  func.func @transform_0(%arg0: i32) -> (i32, i32, i32) {
    %c0_i32 = arith.constant 0 : i32
    %c0_i32_0 = arith.constant 0 : i32
    %c0_i32_1 = arith.constant 0 : i32
    return %arg0, %c0_i32, %c0_i32_0 : i32, i32, i32
  }
  func.func @transform_1(%arg0: i32) -> (i32, i32) {
    %c0_i32 = arith.constant 0 : i32
    %c0_i32_0 = arith.constant 0 : i32
    %c0_i32_1 = arith.constant 0 : i32
    return %c0_i32, %c0_i32_0 : i32, i32
  }
  func.func @transform_2(%arg0: i32) -> (i32, i32) {
    %c0_i32 = arith.constant 0 : i32
    %c0_i32_0 = arith.constant 0 : i32
    %c0_i32_1 = arith.constant 0 : i32
    return %c0_i32, %c0_i32_0 : i32, i32
  }
  func.func @transform_3(%arg0: i32) -> (i32, i32) {
    %c0_i32 = arith.constant 0 : i32
    %c0_i32_0 = arith.constant 0 : i32
    %c0_i32_1 = arith.constant 0 : i32
    return %c0_i32, %c0_i32_0 : i32, i32
  }
  func.func @transform_4(%arg0: i32) -> (i32, i32) {
    %c0_i32 = arith.constant 0 : i32
    %c0_i32_0 = arith.constant 0 : i32
    %c0_i32_1 = arith.constant 0 : i32
    return %c0_i32, %c0_i32_0 : i32, i32
  }
  func.func @transform_5(%arg0: i32) -> (i32, i32) {
    %c0_i32 = arith.constant 0 : i32
    %c0_i32_0 = arith.constant 0 : i32
    %c0_i32_1 = arith.constant 0 : i32
    return %c0_i32, %c0_i32_0 : i32, i32
  }
  func.func @transform_6(%arg0: i32) -> (i32, i32) {
    %c0_i32 = arith.constant 0 : i32
    %c0_i32_0 = arith.constant 0 : i32
    %c0_i32_1 = arith.constant 0 : i32
    return %c0_i32, %c0_i32_0 : i32, i32
  }
  func.func @transform_7(%arg0: i32) -> (i32, i32) {
    %c0_i32 = arith.constant 0 : i32
    %c0_i32_0 = arith.constant 0 : i32
    %c0_i32_1 = arith.constant 0 : i32
    return %c0_i32, %c0_i32_0 : i32, i32
  }
  func.func @transform_8(%arg0: i32) -> (i32, i32) {
    %c0_i32 = arith.constant 0 : i32
    %c0_i32_0 = arith.constant 0 : i32
    %c0_i32_1 = arith.constant 0 : i32
    return %c0_i32, %c0_i32_0 : i32, i32
  }
  func.func @transform_9(%arg0: i32) -> (i32, i32) {
    %c0_i32 = arith.constant 0 : i32
    %c0_i32_0 = arith.constant 0 : i32
    %c0_i32_1 = arith.constant 0 : i32
    return %c0_i32, %c0_i32_0 : i32, i32
  }
  func.func @transform_10(%arg0: i32) -> (i32, i32) {
    %c0_i32 = arith.constant 0 : i32
    %c0_i32_0 = arith.constant 0 : i32
    %c0_i32_1 = arith.constant 0 : i32
    return %c0_i32, %c0_i32_0 : i32, i32
  }
  func.func @transform_11(%arg0: i32) -> (i32, i32) {
    %c0_i32 = arith.constant 0 : i32
    %c0_i32_0 = arith.constant 0 : i32
    %c0_i32_1 = arith.constant 0 : i32
    return %c0_i32, %c0_i32_0 : i32, i32
  }
  func.func @transform_12(%arg0: i32) -> (i32, i32, i32) {
    %c0_i32 = arith.constant 0 : i32
    %c0_i32_0 = arith.constant 0 : i32
    %c0_i32_1 = arith.constant 0 : i32
    return %arg0, %c0_i32, %c0_i32_0 : i32, i32, i32
  }
}

</mosaic_0001>

<llo_original>
// kernel: tpu_custom_call.1
$region0: #{tpu_custom_call.1}
  #allocation0 [shape = 'u32[]', space=smem, size = 0x4, offset = 0x4, fixed_abs, tag = 'smem constant byte address 0x4 - core index']
  #allocation1 [shape = 'u32[144,128]{1,0:T(1,128)}', space=vmem, size = 0x12000, scoped, tag = 'internal scratch']
  %s0 = inlined_call_operand.vmem [shape: f32[2,8,256], index: 0, kind: input, shape index: {}]
  %s1 = inlined_call_operand.hbm [shape: f32[24,72], index: 1, kind: input, shape index: {}]
  %s2 = inlined_call_operand.hbm [shape: f32[8,216], index: 2, kind: input, shape index: {}]
  %s3 = inlined_call_operand.vmem [shape: f32[24,1], index: 3, kind: input, shape index: {}]
  %s4 = inlined_call_operand.vmem [shape: f32[24,1], index: 4, kind: input, shape index: {}]
  %s5 = inlined_call_operand.vmem [shape: f32[8,1], index: 5, kind: input, shape index: {}]
  %s6 = inlined_call_operand.vmem [shape: f32[8,1], index: 6, kind: input, shape index: {}]
  %s7 = inlined_call_operand.vmem [shape: f32[8,1], index: 7, kind: input, shape index: {}]
  %s8 = inlined_call_operand.vmem [shape: f32[8,1], index: 8, kind: input, shape index: {}]
  %s9 = inlined_call_operand.vmem [shape: f32[24,24], index: 9, kind: input, shape index: {}]
  %s10 = inlined_call_operand.vmem [shape: f32[8,8], index: 10, kind: input, shape index: {}]
  %s11 = inlined_call_operand.vmem [shape: f32[9,256], index: 11, kind: input, shape index: {}]
  %s12 = inlined_call_operand.hbm [shape: f32[2,8,256], index: 12, kind: output, shape index: {}]
  %s13 = sld [smem:[#allocation0]]
  $region89: #{tpu_custom_call.1} parent=0
    _
  %s15 = ssub.s32 1, %s13
  %s16 = scalar_select 0, %s15, %s13
  $region1: #{tpu_custom_call.1} parent=0
    #allocation2 [shape = 'u8[12288]{0}', space=vmem, size = 0x3000, scoped, tag = 'input window, operand 1, single buffered']
    #allocation3 [shape = 's32[2]{0}', space=sflag, size = 0x8, scoped, tag = 'scoped memory for tpu_custom_call.1']
    #allocation4 [shape = 's32[2]{0}', space=sflag, size = 0x8, scoped, tag = 'scoped memory for tpu_custom_call.1']
    #allocation5 [shape = 'u8[8192]{0}', space=vmem, size = 0x2000, scoped, tag = 'input window, operand 2, single buffered']
    #allocation6 [shape = 's32[1]{0}', space=sflag, size = 0x4, scoped, tag = 'scoped memory for tpu_custom_call.1']
    #allocation7 [shape = 'u8[16384]{0}', space=vmem, size = 0x4000, scoped, tag = 'output window, operand 0']
    %17 = vsyncpa [#allocation3], 0
    %18 = vsyncpa [#allocation6], 0
    %19 = vsyncpa [#allocation4], 0
    %s20 = scalar_lea.sflag [#allocation4], 1
    %21 = vsyncpa %s20, 0
    loop: start=0, step=1, limit=4
    $region2: #{tpu_custom_call.1} parent=1 // loop_pre_header
      _
    $region3: #{tpu_custom_call.1} parent=1 // loop_header
      %s23 = sphi 0, %s27
      %p24 = scmp.ge.s32.totalorder %s23, 4
      %s33 = sphi 0, %s35
      %s36 = sphi 0, %s33
      %s37 = sphi 0, %s36
      %s53 = sphi 0, %s37
      %s57 = sphi 0, %s57
      %s59 = sphi 0, %s57
      %s60 = sphi 0, %s59
      %s74 = sphi 0, %s60
      %s78 = sphi 0, %s78
      %s80 = sphi 0, %s78
      %s81 = sphi 0, %s80
      %s95 = sphi 0, %s81
      %s99 = sphi 0, %s99
      %s101 = sphi 0, %s99
      %s102 = sphi 0, %s101
      %s116 = sphi 0, %s102
      %s120 = sphi 0, %s120
      %s122 = sphi 0, %s120
      %s123 = sphi 0, %s122
      %s137 = sphi 0, %s123
      %s141 = sphi 0, %s141
      %s143 = sphi 0, %s141
      %s144 = sphi 0, %s143
      %s158 = sphi 0, %s144
      %s162 = sphi 0, %s162
      %s164 = sphi 0, %s162
      %s165 = sphi 0, %s164
      %s179 = sphi 0, %s165
      %s183 = sphi 0, %s183
      %s185 = sphi 0, %s183
      %s186 = sphi 0, %s185
      %s200 = sphi 0, %s186
      %s204 = sphi 0, %s204
      %s206 = sphi 0, %s204
      %s207 = sphi 0, %s206
      %s221 = sphi 0, %s207
      %s225 = sphi 0, %s225
      %s227 = sphi 0, %s225
      %s228 = sphi 0, %s227
      %s242 = sphi 0, %s228
      %s246 = sphi 0, %s246
      %s248 = sphi 0, %s246
      %s249 = sphi 0, %s248
      %s263 = sphi 0, %s249
      %s267 = sphi 0, %s267
      %s269 = sphi 0, %s267
      %s270 = sphi 0, %s269
      %s284 = sphi 0, %s270
      %s290 = sphi 0, %s292
      %s293 = sphi 0, %s290
      %s294 = sphi 0, %s293
      %s310 = sphi 0, %s294
    $region4: #{tpu_custom_call.1} parent=1 // loop_header_branch
      %26 = sbr.rel (%p24) target = $region8
    $region5: #{tpu_custom_call.1} parent=1 // loop_body
      %s28 = ssub.s32 %s23, 1
      %s29 = ssub.s32 %s23, 2
      %s30 = sadd.s32 %s23, 1
      %s31 = ssub.s32 %s23, %s30
      %p32 = scmp.eq.s32.totalorder %s31, 0
      %s34 = sadd.s32 %s33, 1
      %s35 = scalar_select %p32, %s33, %s34
      %p38 = pneg %p32
      %p39 = scmp.eq.s32.totalorder %s23, 1
      %p40 = por %p38, %p39
      %p41 = scmp.ne.s32.totalorder %s33, %s36
      %p42 = scmp.eq.s32.totalorder %s23, 0
      %p43 = por %p41, %p42
      %p44 = scmp.ne.s32.totalorder %s33, %s36
      %p45 = scmp.eq.s32.totalorder %s28, 1
      %p46 = por %p44, %p45
      %p47 = scmp.ne.s32.totalorder %s36, %s37
      %p48 = scmp.eq.s32.totalorder %s28, 0
      %p49 = por %p47, %p48
      %p50 = scmp.ne.s32.totalorder %s36, %s37
      %p51 = scmp.eq.s32.totalorder %s29, 1
      %p52 = por %p50, %p51
      %p54 = scmp.ne.s32.totalorder %s37, %s53
      %p55 = scmp.eq.s32.totalorder %s29, 0
      %p56 = por %p54, %p55
      %s58 = sadd.s32 %s57, 1
      %p61 = scmp.eq.s32.totalorder %s23, 1
      %p62 = scmp.ne.s32.totalorder %s57, %s59
      %p63 = scmp.eq.s32.totalorder %s23, 0
      %p64 = por %p62, %p63
      %p65 = scmp.ne.s32.totalorder %s57, %s59
      %p66 = scmp.eq.s32.totalorder %s28, 1
      %p67 = por %p65, %p66
      %p68 = scmp.ne.s32.totalorder %s59, %s60
      %p69 = scmp.eq.s32.totalorder %s28, 0
      %p70 = por %p68, %p69
      %p71 = scmp.ne.s32.totalorder %s59, %s60
      %p72 = scmp.eq.s32.totalorder %s29, 1
      %p73 = por %p71, %p72
      %p75 = scmp.ne.s32.totalorder %s60, %s74
      %p76 = scmp.eq.s32.totalorder %s29, 0
      %p77 = por %p75, %p76
      %s79 = sadd.s32 %s78, 1
      %p82 = scmp.eq.s32.totalorder %s23, 1
      %p83 = scmp.ne.s32.totalorder %s78, %s80
      %p84 = scmp.eq.s32.totalorder %s23, 0
      %p85 = por %p83, %p84
      %p86 = scmp.ne.s32.totalorder %s78, %s80
      %p87 = scmp.eq.s32.totalorder %s28, 1
      %p88 = por %p86, %p87
      %p89 = scmp.ne.s32.totalorder %s80, %s81
      %p90 = scmp.eq.s32.totalorder %s28, 0
      %p91 = por %p89, %p90
      %p92 = scmp.ne.s32.totalorder %s80, %s81
      %p93 = scmp.eq.s32.totalorder %s29, 1
      %p94 = por %p92, %p93
      %p96 = scmp.ne.s32.totalorder %s81, %s95
      %p97 = scmp.eq.s32.totalorder %s29, 0
      %p98 = por %p96, %p97
      %s100 = sadd.s32 %s99, 1
      %p103 = scmp.eq.s32.totalorder %s23, 1
      %p104 = scmp.ne.s32.totalorder %s99, %s101
      %p105 = scmp.eq.s32.totalorder %s23, 0
      %p106 = por %p104, %p105
      %p107 = scmp.ne.s32.totalorder %s99, %s101
      %p108 = scmp.eq.s32.totalorder %s28, 1
      %p109 = por %p107, %p108
      %p110 = scmp.ne.s32.totalorder %s101, %s102
      %p111 = scmp.eq.s32.totalorder %s28, 0
      %p112 = por %p110, %p111
      %p113 = scmp.ne.s32.totalorder %s101, %s102
      %p114 = scmp.eq.s32.totalorder %s29, 1
      %p115 = por %p113, %p114
      %p117 = scmp.ne.s32.totalorder %s102, %s116
      %p118 = scmp.eq.s32.totalorder %s29, 0
      %p119 = por %p117, %p118
      %s121 = sadd.s32 %s120, 1
      %p124 = scmp.eq.s32.totalorder %s23, 1
      %p125 = scmp.ne.s32.totalorder %s120, %s122
      %p126 = scmp.eq.s32.totalorder %s23, 0
      %p127 = por %p125, %p126
      %p128 = scmp.ne.s32.totalorder %s120, %s122
      %p129 = scmp.eq.s32.totalorder %s28, 1
      %p130 = por %p128, %p129
      %p131 = scmp.ne.s32.totalorder %s122, %s123
      %p132 = scmp.eq.s32.totalorder %s28, 0
      %p133 = por %p131, %p132
      %p134 = scmp.ne.s32.totalorder %s122, %s123
      %p135 = scmp.eq.s32.totalorder %s29, 1
      %p136 = por %p134, %p135
      %p138 = scmp.ne.s32.totalorder %s123, %s137
      %p139 = scmp.eq.s32.totalorder %s29, 0
      %p140 = por %p138, %p139
      %s142 = sadd.s32 %s141, 1
      %p145 = scmp.eq.s32.totalorder %s23, 1
      %p146 = scmp.ne.s32.totalorder %s141, %s143
      %p147 = scmp.eq.s32.totalorder %s23, 0
      %p148 = por %p146, %p147
      %p149 = scmp.ne.s32.totalorder %s141, %s143
      %p150 = scmp.eq.s32.totalorder %s28, 1
      %p151 = por %p149, %p150
      %p152 = scmp.ne.s32.totalorder %s143, %s144
      %p153 = scmp.eq.s32.totalorder %s28, 0
      %p154 = por %p152, %p153
      %p155 = scmp.ne.s32.totalorder %s143, %s144
      %p156 = scmp.eq.s32.totalorder %s29, 1
      %p157 = por %p155, %p156
      %p159 = scmp.ne.s32.totalorder %s144, %s158
      %p160 = scmp.eq.s32.totalorder %s29, 0
      %p161 = por %p159, %p160
      %s163 = sadd.s32 %s162, 1
      %p166 = scmp.eq.s32.totalorder %s23, 1
      %p167 = scmp.ne.s32.totalorder %s162, %s164
      %p168 = scmp.eq.s32.totalorder %s23, 0
      %p169 = por %p167, %p168
      %p170 = scmp.ne.s32.totalorder %s162, %s164
      %p171 = scmp.eq.s32.totalorder %s28, 1
      %p172 = por %p170, %p171
      %p173 = scmp.ne.s32.totalorder %s164, %s165
      %p174 = scmp.eq.s32.totalorder %s28, 0
      %p175 = por %p173, %p174
      %p176 = scmp.ne.s32.totalorder %s164, %s165
      %p177 = scmp.eq.s32.totalorder %s29, 1
      %p178 = por %p176, %p177
      %p180 = scmp.ne.s32.totalorder %s165, %s179
      %p181 = scmp.eq.s32.totalorder %s29, 0
      %p182 = por %p180, %p181
      %s184 = sadd.s32 %s183, 1
      %p187 = scmp.eq.s32.totalorder %s23, 1
      %p188 = scmp.ne.s32.totalorder %s183, %s185
      %p189 = scmp.eq.s32.totalorder %s23, 0
      %p190 = por %p188, %p189
      %p191 = scmp.ne.s32.totalorder %s183, %s185
      %p192 = scmp.eq.s32.totalorder %s28, 1
      %p193 = por %p191, %p192
      %p194 = scmp.ne.s32.totalorder %s185, %s186
      %p195 = scmp.eq.s32.totalorder %s28, 0
      %p196 = por %p194, %p195
      %p197 = scmp.ne.s32.totalorder %s185, %s186
      %p198 = scmp.eq.s32.totalorder %s29, 1
      %p199 = por %p197, %p198
      %p201 = scmp.ne.s32.totalorder %s186, %s200
      %p202 = scmp.eq.s32.totalorder %s29, 0
      %p203 = por %p201, %p202
      %s205 = sadd.s32 %s204, 1
      %p208 = scmp.eq.s32.totalorder %s23, 1
      %p209 = scmp.ne.s32.totalorder %s204, %s206
      %p210 = scmp.eq.s32.totalorder %s23, 0
      %p211 = por %p209, %p210
      %p212 = scmp.ne.s32.totalorder %s204, %s206
      %p213 = scmp.eq.s32.totalorder %s28, 1
      %p214 = por %p212, %p213
      %p215 = scmp.ne.s32.totalorder %s206, %s207
      %p216 = scmp.eq.s32.totalorder %s28, 0
      %p217 = por %p215, %p216
      %p218 = scmp.ne.s32.totalorder %s206, %s207
      %p219 = scmp.eq.s32.totalorder %s29, 1
      %p220 = por %p218, %p219
      %p222 = scmp.ne.s32.totalorder %s207, %s221
      %p223 = scmp.eq.s32.totalorder %s29, 0
      %p224 = por %p222, %p223
      %s226 = sadd.s32 %s225, 1
      %p229 = scmp.eq.s32.totalorder %s23, 1
      %p230 = scmp.ne.s32.totalorder %s225, %s227
      %p231 = scmp.eq.s32.totalorder %s23, 0
      %p232 = por %p230, %p231
      %p233 = scmp.ne.s32.totalorder %s225, %s227
      %p234 = scmp.eq.s32.totalorder %s28, 1
      %p235 = por %p233, %p234
      %p236 = scmp.ne.s32.totalorder %s227, %s228
      %p237 = scmp.eq.s32.totalorder %s28, 0
      %p238 = por %p236, %p237
      %p239 = scmp.ne.s32.totalorder %s227, %s228
      %p240 = scmp.eq.s32.totalorder %s29, 1
      %p241 = por %p239, %p240
      %p243 = scmp.ne.s32.totalorder %s228, %s242
      %p244 = scmp.eq.s32.totalorder %s29, 0
      %p245 = por %p243, %p244
      %s247 = sadd.s32 %s246, 1
      %p250 = scmp.eq.s32.totalorder %s23, 1
      %p251 = scmp.ne.s32.totalorder %s246, %s248
      %p252 = scmp.eq.s32.totalorder %s23, 0
      %p253 = por %p251, %p252
      %p254 = scmp.ne.s32.totalorder %s246, %s248
      %p255 = scmp.eq.s32.totalorder %s28, 1
      %p256 = por %p254, %p255
      %p257 = scmp.ne.s32.totalorder %s248, %s249
      %p258 = scmp.eq.s32.totalorder %s28, 0
      %p259 = por %p257, %p258
      %p260 = scmp.ne.s32.totalorder %s248, %s249
      %p261 = scmp.eq.s32.totalorder %s29, 1
      %p262 = por %p260, %p261
      %p264 = scmp.ne.s32.totalorder %s249, %s263
      %p265 = scmp.eq.s32.totalorder %s29, 0
      %p266 = por %p264, %p265
      %s268 = sadd.s32 %s267, 1
      %p271 = scmp.eq.s32.totalorder %s23, 1
      %p272 = scmp.ne.s32.totalorder %s267, %s269
      %p273 = scmp.eq.s32.totalorder %s23, 0
      %p274 = por %p272, %p273
      %p275 = scmp.ne.s32.totalorder %s267, %s269
      %p276 = scmp.eq.s32.totalorder %s28, 1
      %p277 = por %p275, %p276
      %p278 = scmp.ne.s32.totalorder %s269, %s270
      %p279 = scmp.eq.s32.totalorder %s28, 0
      %p280 = por %p278, %p279
      %p281 = scmp.ne.s32.totalorder %s269, %s270
      %p282 = scmp.eq.s32.totalorder %s29, 1
      %p283 = por %p281, %p282
      %p285 = scmp.ne.s32.totalorder %s270, %s284
      %p286 = scmp.eq.s32.totalorder %s29, 0
      %p287 = por %p285, %p286
      %s288 = ssub.s32 %s23, %s30
      %p289 = scmp.eq.s32.totalorder %s288, 0
      %s291 = sadd.s32 %s290, 1
      %s292 = scalar_select %p289, %s290, %s291
      %p295 = pneg %p289
      %p296 = scmp.eq.s32.totalorder %s23, 1
      %p297 = por %p295, %p296
      %p298 = scmp.ne.s32.totalorder %s290, %s293
      %p299 = scmp.eq.s32.totalorder %s23, 0
      %p300 = por %p298, %p299
      %p301 = scmp.ne.s32.totalorder %s290, %s293
      %p302 = scmp.eq.s32.totalorder %s28, 1
      %p303 = por %p301, %p302
      %p304 = scmp.ne.s32.totalorder %s293, %s294
      %p305 = scmp.eq.s32.totalorder %s28, 0
      %p306 = por %p304, %p305
      %p307 = scmp.ne.s32.totalorder %s293, %s294
      %p308 = scmp.eq.s32.totalorder %s29, 1
      %p309 = por %p307, %p308
      %p311 = scmp.ne.s32.totalorder %s294, %s310
      %p312 = scmp.eq.s32.totalorder %s29, 0
      %p313 = por %p311, %p312
      %p314 = scmp.le.s32.totalorder 1, %s23
      %p315 = scmp.lt.s32.totalorder %s23, 3
      %p316 = pnand %p314, %p315
      %p317 = pneg %p316
      // Predicated region
      $region9: #{tpu_custom_call.1} parent=5 // pred_check
        _
      $region10: #{tpu_custom_call.1} parent=5 // pred_check_branch
        %319 = sbr.rel (%p316) target = $region12
      $region11: #{tpu_custom_call.1} parent=5 // pred_region
        %s320 = ssub.s32 %s23, 1
        // Predicated region
        $region13: #{tpu_custom_call.1} parent=11 // pred_check
          %p321 = pneg %p70
        $region14: #{tpu_custom_call.1} parent=11 // pred_check_branch
          %323 = sbr.rel (%p321) target = $region16
        $region15: #{tpu_custom_call.1} parent=11 // pred_region
          %s325 = ssub.s32 384, 384
          %326 = vsyncadd [#allocation3], %s325
          %s327 = sshll.u32 [#allocation2], 4
          %s328 = int_to_ptr.vmem [resolvable:$true] %s327
          %333 = dma.hbm_to_vmem [thread:$0]  %s1, 384, %s328, [#allocation3], 128, 128, 8
        $region16: #{tpu_custom_call.1} parent=11 // pred_fallthru
          _
        // Predicated region
        $region17: #{tpu_custom_call.1} parent=11 // pred_check
          %p334 = pneg %p91
        $region18: #{tpu_custom_call.1} parent=11 // pred_check_branch
          %336 = sbr.rel (%p334) target = $region20
        $region19: #{tpu_custom_call.1} parent=11 // pred_region
          %s338 = ssub.s32 256, 256
          %339 = vsyncadd [#allocation6], %s338
          %s341 = sshll.u32 [#allocation5], 4
          %s342 = int_to_ptr.vmem [resolvable:$true] %s341
          %344 = dma.hbm_to_vmem [thread:$0]  %s2, 256, %s342, [#allocation6]
        $region20: #{tpu_custom_call.1} parent=11 // pred_fallthru
          _
        // Predicated region
        $region21: #{tpu_custom_call.1} parent=11 // pred_check
          %p345 = pneg %p112
        $region22: #{tpu_custom_call.1} parent=11 // pred_check_branch
          %347 = sbr.rel (%p345) target = $region24
        $region23: #{tpu_custom_call.1} parent=11 // pred_region
          _
        $region24: #{tpu_custom_call.1} parent=11 // pred_fallthru
          _
        // Predicated region
        $region25: #{tpu_custom_call.1} parent=11 // pred_check
          %p348 = pneg %p133
        $region26: #{tpu_custom_call.1} parent=11 // pred_check_branch
          %350 = sbr.rel (%p348) target = $region28
        $region27: #{tpu_custom_call.1} parent=11 // pred_region
          _
        $region28: #{tpu_custom_call.1} parent=11 // pred_fallthru
          _
        // Predicated region
        $region29: #{tpu_custom_call.1} parent=11 // pred_check
          %p351 = pneg %p154
        $region30: #{tpu_custom_call.1} parent=11 // pred_check_branch
          %353 = sbr.rel (%p351) target = $region32
        $region31: #{tpu_custom_call.1} parent=11 // pred_region
          _
        $region32: #{tpu_custom_call.1} parent=11 // pred_fallthru
          _
        // Predicated region
        $region33: #{tpu_custom_call.1} parent=11 // pred_check
          %p354 = pneg %p175
        $region34: #{tpu_custom_call.1} parent=11 // pred_check_branch
          %356 = sbr.rel (%p354) target = $region36
        $region35: #{tpu_custom_call.1} parent=11 // pred_region
          _
        $region36: #{tpu_custom_call.1} parent=11 // pred_fallthru
          _
        // Predicated region
        $region37: #{tpu_custom_call.1} parent=11 // pred_check
          %p357 = pneg %p196
        $region38: #{tpu_custom_call.1} parent=11 // pred_check_branch
          %359 = sbr.rel (%p357) target = $region40
        $region39: #{tpu_custom_call.1} parent=11 // pred_region
          _
        $region40: #{tpu_custom_call.1} parent=11 // pred_fallthru
          _
        // Predicated region
        $region41: #{tpu_custom_call.1} parent=11 // pred_check
          %p360 = pneg %p217
        $region42: #{tpu_custom_call.1} parent=11 // pred_check_branch
          %362 = sbr.rel (%p360) target = $region44
        $region43: #{tpu_custom_call.1} parent=11 // pred_region
          _
        $region44: #{tpu_custom_call.1} parent=11 // pred_fallthru
          _
        // Predicated region
        $region45: #{tpu_custom_call.1} parent=11 // pred_check
          %p363 = pneg %p238
        $region46: #{tpu_custom_call.1} parent=11 // pred_check_branch
          %365 = sbr.rel (%p363) target = $region48
        $region47: #{tpu_custom_call.1} parent=11 // pred_region
          _
        $region48: #{tpu_custom_call.1} parent=11 // pred_fallthru
          _
        // Predicated region
        $region49: #{tpu_custom_call.1} parent=11 // pred_check
          %p366 = pneg %p259
        $region50: #{tpu_custom_call.1} parent=11 // pred_check_branch
          %368 = sbr.rel (%p366) target = $region52
        $region51: #{tpu_custom_call.1} parent=11 // pred_region
          _
        $region52: #{tpu_custom_call.1} parent=11 // pred_fallthru
          _
        // Predicated region
        $region53: #{tpu_custom_call.1} parent=11 // pred_check
          %p369 = pneg %p280
        $region54: #{tpu_custom_call.1} parent=11 // pred_check_branch
          %371 = sbr.rel (%p369) target = $region56
        $region55: #{tpu_custom_call.1} parent=11 // pred_region
          _
        $region56: #{tpu_custom_call.1} parent=11 // pred_fallthru
          _
      $region12: #{tpu_custom_call.1} parent=5 // pred_fallthru
        _
      %p372 = scmp.lt.s32.totalorder %s23, 2
      // Predicated region
      $region57: #{tpu_custom_call.1} parent=5 // pred_check
        %p373 = pneg %p372
      $region58: #{tpu_custom_call.1} parent=5 // pred_check_branch
        %375 = sbr.rel (%p373) target = $region60
      $region59: #{tpu_custom_call.1} parent=5 // pred_region
        // Predicated region
        $region61: #{tpu_custom_call.1} parent=59 // pred_check
          %p376 = pneg %p43
        $region62: #{tpu_custom_call.1} parent=59 // pred_check_branch
          %378 = sbr.rel (%p376) target = $region64
        $region63: #{tpu_custom_call.1} parent=59 // pred_region
          %p379 = scmp.lt.s32.totalorder %s23, 1
          %s380 = scalar_select %p379, %s23, 1
          %s381 = smul.addr %s380, 2
          %s382 = smul.addr %s381, 8
          %s383 = scalar_lea.vmem %s0, %s382
        $region64: #{tpu_custom_call.1} parent=59 // pred_fallthru
          _
      $region60: #{tpu_custom_call.1} parent=5 // pred_fallthru
        _
      %p384 = scmp.le.s32.totalorder 1, %s23
      %p385 = scmp.lt.s32.totalorder %s23, 3
      %p386 = pnand %p384, %p385
      %p387 = pneg %p386
      // Predicated region
      $region65: #{tpu_custom_call.1} parent=5 // pred_check
        _
      $region66: #{tpu_custom_call.1} parent=5 // pred_check_branch
        %389 = sbr.rel (%p386) target = $region68
      $region67: #{tpu_custom_call.1} parent=5 // pred_region
        %s390 = ssub.s32 %s23, 1
        // Predicated region
        $region69: #{tpu_custom_call.1} parent=67 // pred_check
          %p391 = pneg %p70
        $region70: #{tpu_custom_call.1} parent=67 // pred_check_branch
          %393 = sbr.rel (%p391) target = $region72
        $region71: #{tpu_custom_call.1} parent=67 // pred_region
          %394 = dma.done [#allocation3], 384
        $region72: #{tpu_custom_call.1} parent=67 // pred_fallthru
          _
        // Predicated region
        $region73: #{tpu_custom_call.1} parent=67 // pred_check
          %p395 = pneg %p91
        $region74: #{tpu_custom_call.1} parent=67 // pred_check_branch
          %397 = sbr.rel (%p395) target = $region76
        $region75: #{tpu_custom_call.1} parent=67 // pred_region
          %398 = dma.done [#allocation6], 256
        $region76: #{tpu_custom_call.1} parent=67 // pred_fallthru
          _
        %p399 = scmp.lt.s32.totalorder %s28, 1
        %s400 = scalar_select %p399, %s28, 1
        %s401 = smul.addr %s400, 2
        %s402 = smul.addr %s401, 8
        %s403 = scalar_lea.vmem %s0, %s402
        %p404 = pneg %p49
        %p405 = pneg %p46
        %p406 = pneg %p70
        %p407 = pneg %p67
        %p408 = pneg %p91
        %p409 = pneg %p88
        %p410 = pneg %p112
        %p411 = pneg %p109
        %p412 = pneg %p133
        %p413 = pneg %p130
        %p414 = pneg %p154
        %p415 = pneg %p151
        %p416 = pneg %p175
        %p417 = pneg %p172
        %p418 = pneg %p196
        %p419 = pneg %p193
        %p420 = pneg %p217
        %p421 = pneg %p214
        %p422 = pneg %p238
        %p423 = pneg %p235
        %p424 = pneg %p259
        %p425 = pneg %p256
        %p426 = pneg %p280
        %p427 = pneg %p277
        %p428 = pneg %p306
        %p429 = pneg %p303
        %s430 = sand.u32 %s293, 1
        %s431 = scalar_lea.sflag [#allocation4], %s430
        %s432 = sand.u32 %s293, 1
        %s433 = smul.addr %s432, 16
        %s434 = scalar_lea.vmem [#allocation7], %s433
        %p435 = scmp.lt.s32.totalorder %s28, 1
        %s436 = scalar_select %p435, %s28, 1
        %s437 = smul.addr %s436, 2
        %s438 = smul.addr %s437, 8
        %s439 = scalar_lea.vmem %s0, %s438
        %v440 = vld [vmem:[%s11] sm:$0xff]
        %v441 = vld [vmem:[%s11 + $0x8] sm:$0xff]
        %v442 = vld [vmem:[%s11 + $0x10] sm:$0x1]
        %v443 = vld [vmem:[%s11 + $0x18] sm:$0x1]
        %v444 = vld [vmem:[%s439] sm:$0xff]
        %v445 = vld [vmem:[%s439 + $0x8] sm:$0xff]
        %v446 = vld [vmem:[#allocation2] sm:$0xff]
        %v447 = vld [vmem:[#allocation2 + $0x8] sm:$0xff]
        %v448 = vld [vmem:[#allocation2 + $0x10] sm:$0xff]
        %449 = vrot.lane.b32.xlu0 %v444, 17
        %v450 = vpop.permute.xlu0 %449
        %451 = vrot.lane.b32.xlu0 %v445, 17
        %v452 = vpop.permute.xlu0 %451
        %v453 = vlaneseq
        %v454 = vand.u32 %v453, 127
        %vm455 = vcmp.lt.s32.totalorder %v454, 17
        %v456 = vsel %vm455, %v450, %v452
        %v457 = vsel %vm455, %v452, %v450
        %v458 = vlaneseq
        %v459 = vshrl.u32 %v458, 7
        %v460 = vsub.s32 0, %v459
        %v461 = vrot.slane %v440, %v460
        %v462 = vlaneseq
        %v463 = vshrl.u32 %v462, 7
        %v464 = vsub.s32 0, %v463
        %v465 = vrot.slane %v441, %v464
        %v466 = vmul.f32 %v457, %v461
        %v467 = vmul.f32 %v456, %v465
        %468 = vrot.lane.b32.xlu0 %v444, 16
        %v469 = vpop.permute.xlu0 %468
        %470 = vrot.lane.b32.xlu0 %v445, 16
        %v471 = vpop.permute.xlu0 %470
        %vm472 = vcmp.lt.s32.totalorder %v454, 16
        %v473 = vsel %vm472, %v469, %v471
        %v474 = vsel %vm472, %v471, %v469
        %v475 = vlaneseq
        %v476 = vshrl.u32 %v475, 7
        %v477 = vsub.s32 1, %v476
        %v478 = vrot.slane %v440, %v477
        %v479 = vlaneseq
        %v480 = vshrl.u32 %v479, 7
        %v481 = vsub.s32 1, %v480
        %v482 = vrot.slane %v441, %v481
        %v483 = vmul.f32 %v474, %v478
        %v484 = vmul.f32 %v473, %v482
        %485 = vrot.lane.b32.xlu0 %v444, 15
        %v486 = vpop.permute.xlu0 %485
        %487 = vrot.lane.b32.xlu0 %v445, 15
        %v488 = vpop.permute.xlu0 %487
        %vm489 = vcmp.lt.s32.totalorder %v454, 15
        %v490 = vsel %vm489, %v486, %v488
        %v491 = vsel %vm489, %v488, %v486
        %v492 = vlaneseq
        %v493 = vshrl.u32 %v492, 7
        %v494 = vsub.s32 2, %v493
        %v495 = vrot.slane %v440, %v494
        %v496 = vlaneseq
        %v497 = vshrl.u32 %v496, 7
        %v498 = vsub.s32 2, %v497
        %v499 = vrot.slane %v441, %v498
        %v500 = vmul.f32 %v491, %v495
        %v501 = vmul.f32 %v490, %v499
        %502 = vrot.lane.b32.xlu0 %v444, 1
        %v503 = vpop.permute.xlu0 %502
        %504 = vrot.lane.b32.xlu0 %v445, 1
        %v505 = vpop.permute.xlu0 %504
        %vm506 = vcmp.lt.s32.totalorder %v454, 1
        %v507 = vsel %vm506, %v503, %v505
        %v508 = vsel %vm506, %v505, %v503
        %v509 = vlaneseq
        %v510 = vshrl.u32 %v509, 7
        %v511 = vsub.s32 3, %v510
        %v512 = vrot.slane %v440, %v511
        %v513 = vlaneseq
        %v514 = vshrl.u32 %v513, 7
        %v515 = vsub.s32 3, %v514
        %v516 = vrot.slane %v441, %v515
        %v517 = vmul.f32 %v508, %v512
        %v518 = vmul.f32 %v507, %v516
        %519 = vrot.lane.b32.xlu0 %v444, 127
        %v520 = vpop.permute.xlu0 %519
        %521 = vrot.lane.b32.xlu0 %v445, 127
        %v522 = vpop.permute.xlu0 %521
        %vm523 = vcmp.lt.s32.totalorder %v454, 127
        %v524 = vsel %vm523, %v520, %v522
        %v525 = vsel %vm523, %v522, %v520
        %v526 = vlaneseq
        %v527 = vshrl.u32 %v526, 7
        %v528 = vsub.s32 5, %v527
        %v529 = vrot.slane %v440, %v528
        %v530 = vlaneseq
        %v531 = vshrl.u32 %v530, 7
        %v532 = vsub.s32 5, %v531
        %v533 = vrot.slane %v441, %v532
        %v534 = vmul.f32 %v524, %v529
        %v535 = vmul.f32 %v525, %v533
        %536 = vrot.lane.b32.xlu0 %v444, 113
        %v537 = vpop.permute.xlu0 %536
        %538 = vrot.lane.b32.xlu0 %v445, 113
        %v539 = vpop.permute.xlu0 %538
        %vm540 = vcmp.lt.s32.totalorder %v454, 113
        %v541 = vsel %vm540, %v537, %v539
        %v542 = vsel %vm540, %v539, %v537
        %v543 = vlaneseq
        %v544 = vshrl.u32 %v543, 7
        %v545 = vsub.s32 6, %v544
        %v546 = vrot.slane %v440, %v545
        %v547 = vlaneseq
        %v548 = vshrl.u32 %v547, 7
        %v549 = vsub.s32 6, %v548
        %v550 = vrot.slane %v441, %v549
        %v551 = vmul.f32 %v541, %v546
        %v552 = vmul.f32 %v542, %v550
        %553 = vrot.lane.b32.xlu0 %v444, 112
        %v554 = vpop.permute.xlu0 %553
        %555 = vrot.lane.b32.xlu0 %v445, 112
        %v556 = vpop.permute.xlu0 %555
        %vm557 = vcmp.lt.s32.totalorder %v454, 112
        %v558 = vsel %vm557, %v554, %v556
        %v559 = vsel %vm557, %v556, %v554
        %v560 = vlaneseq
        %v561 = vshrl.u32 %v560, 7
        %v562 = vsub.s32 7, %v561
        %v563 = vrot.slane %v440, %v562
        %v564 = vlaneseq
        %v565 = vshrl.u32 %v564, 7
        %v566 = vsub.s32 7, %v565
        %v567 = vrot.slane %v441, %v566
        %v568 = vmul.f32 %v558, %v563
        %v569 = vmul.f32 %v559, %v567
        %570 = vrot.lane.b32.xlu0 %v444, 111
        %v571 = vpop.permute.xlu0 %570
        %572 = vrot.lane.b32.xlu0 %v445, 111
        %v573 = vpop.permute.xlu0 %572
        %vm574 = vcmp.lt.s32.totalorder %v454, 111
        %v575 = vsel %vm574, %v571, %v573
        %v576 = vsel %vm574, %v573, %v571
        %v577 = vlaneseq
        %v578 = vshrl.u32 %v577, 7
        %v579 = vsub.s32 0, %v578
        %v580 = vrot.slane %v442, %v579
        %v581 = vlaneseq
        %v582 = vshrl.u32 %v581, 7
        %v583 = vsub.s32 0, %v582
        %v584 = vrot.slane %v443, %v583
        %v585 = vmul.f32 %v575, %v580
        %v586 = vmul.f32 %v576, %v584
        %vm587 = vcmask 588800
        %v589 = vsel %vm587, %v446, 0
        %v592 = vsel %vm587, %v447, 0
        %v595 = vsel %vm587, %v448, 0
        %597 = vmatprep.subr.mxu0 0.0
        %598 = vmatpush1.msra.mxu0 0.0
        %599 = vmatprep.subr.mxu0 0.0
        %600 = vmatpush1.msra.mxu0 0.0
        %601 = vmatprep.subr.mxu0 0.0
        %602 = vmatpush1.msra.mxu0 0.0
        %603 = vmatprep.subr.mxu0 0.0
        %604 = vmatpush1.msra.mxu0 0.0
        %605 = vmatprep.subr.mxu0 0.0
        %606 = vmatpush1.msra.mxu0 0.0
        %607 = vmatprep.subr.mxu0 0.0
        %608 = vmatpush1.msra.mxu0 0.0
        %609 = vmatprep.subr.mxu0 0.0
        %610 = vmatpush1.msra.mxu0 0.0
        %611 = vmatprep.subr.mxu0 %v586
        %612 = vmatpush1.msra.mxu0 %v585
        %613 = vmatprep.subr.mxu0 %v569
        %614 = vmatpush1.msra.mxu0 %v568
        %615 = vmatprep.subr.mxu0 %v552
        %616 = vmatpush1.msra.mxu0 %v551
        %617 = vmatprep.subr.mxu0 %v535
        %618 = vmatpush1.msra.mxu0 %v534
        %619 = vmatprep.subr.mxu0 %v445
        %620 = vmatpush1.msra.mxu0 %v444
        %621 = vmatprep.subr.mxu0 %v518
        %622 = vmatpush1.msra.mxu0 %v517
        %623 = vmatprep.subr.mxu0 %v501
        %624 = vmatpush1.msra.mxu0 %v500
        %625 = vmatprep.subr.mxu0 %v484
        %626 = vmatpush1.msra.mxu0 %v483
        %627 = vmatprep.subr.mxu0 %v467
        %628 = vmatpush1.msra.mxu0 %v466
        %629 = vmatprep.subr.mxu0 0.0
        %630 = vmatpush2.msra.mxu0 0.0
        %631 = vmatprep.subr.mxu0 0.0
        %632 = vmatpush2.msra.mxu0 0.0
        %633 = vmatprep.subr.mxu0 0.0
        %634 = vmatpush2.msra.mxu0 0.0
        %635 = vmatprep.subr.mxu0 0.0
        %636 = vmatpush2.msra.mxu0 0.0
        %637 = vmatprep.subr.mxu0 0.0
        %638 = vmatpush2.msra.mxu0 0.0
        %639 = vmatprep.subr.mxu0 0.0
        %640 = vmatpush2.msra.mxu0 0.0
        %641 = vmatprep.subr.mxu0 0.0
        %642 = vmatpush2.msra.mxu0 0.0
        %643 = vmatprep.subr.mxu0 0.0
        %644 = vmatpush2.msra.mxu0 0.0
        %645 = vmatprep.subr.mxu0 0.0
        %646 = vmatpush2.msra.mxu0 0.0
        %647 = vmatprep.subr.mxu0 0.0
        %648 = vmatpush2.msra.mxu0 0.0
        %649 = vmatprep.subr.mxu0 0.0
        %650 = vmatpush2.msra.mxu0 0.0
        %651 = vmatprep.subr.mxu0 0.0
        %652 = vmatpush2.msra.mxu0 0.0
        %653 = vmatprep.subr.mxu0 0.0
        %654 = vmatpush2.msra.mxu0 0.0
        %655 = vmatprep.subr.mxu0 0.0
        %656 = vmatpush2.msra.mxu0 0.0
        %657 = vmatprep.subr.mxu0 0.0
        %658 = vmatpush2.msra.mxu0 0.0
        %659 = vmatprep.subr.mxu0 0.0
        %660 = vmatpush2.msra.mxu0 0.0
        %661 = vmatprep.mubr.f32.mxu0 0.0
        %662 = vmatmul.mubr.f32.gmra.mxu0 %v589
        %v663 = vpop.f32.mrf.mxu0
        %v664 = vadd.f32 0.0, %v663
        %v665 = vpop.f32.mrf.mxu0
        %v666 = vadd.f32 0.0, %v665
        %667 = vmatprep.mubr.f32.mxu0 0.0
        %668 = vmatmul.mubr.f32.gmra.mxu0 %v592
        %v669 = vpop.f32.mrf.mxu0
        %v670 = vadd.f32 0.0, %v669
        %v671 = vpop.f32.mrf.mxu0
        %v672 = vadd.f32 0.0, %v671
        %673 = vmatprep.mubr.f32.mxu0 0.0
        %674 = vmatmul.mubr.f32.gmra.mxu0 %v595
        %v675 = vpop.f32.mrf.mxu0
        %v676 = vadd.f32 0.0, %v675
        %v677 = vpop.f32.mrf.mxu0
        %v678 = vadd.f32 0.0, %v677
        %679 = vdwg.mxu0
        %v680 = vld [vmem:[%s3] sm:$0xff]
        %v681 = vld [vmem:[%s3 + $0x8] sm:$0xff]
        %v682 = vld [vmem:[%s3 + $0x10] sm:$0xff]
        %v683 = vld [vmem:[%s4] sm:$0xff]
        %v684 = vld [vmem:[%s4 + $0x8] sm:$0xff]
        %v685 = vld [vmem:[%s4 + $0x10] sm:$0xff]
        %v686 = vld [vmem:[%s9] sm:$0xff]
        %v687 = vld [vmem:[%s9 + $0x8] sm:$0xff]
        %v688 = vld [vmem:[%s9 + $0x10] sm:$0xff]
        %v689 = vadd.f32 %v664, %v666
        %690 = vadd.xlane.f32.xlu0 %v689
        %v691 = vpop.xlane.xlu0 %690
        %v692 = vadd.f32 %v670, %v672
        %693 = vadd.xlane.f32.xlu0 %v692
        %v694 = vpop.xlane.xlu0 %693
        %v695 = vadd.f32 %v676, %v678
        %696 = vadd.xlane.f32.xlu0 %v695
        %v697 = vpop.xlane.xlu0 %696
        %v698 = vmul.f32 %v664, %v664
        %v699 = vmul.f32 %v666, %v666
        %v700 = vmul.f32 %v670, %v670
        %v701 = vmul.f32 %v672, %v672
        %v702 = vmul.f32 %v676, %v676
        %v703 = vmul.f32 %v678, %v678
        %v704 = vadd.f32 %v698, %v699
        %705 = vadd.xlane.f32.xlu0 %v704
        %v706 = vpop.xlane.xlu0 %705
        %v707 = vadd.f32 %v700, %v701
        %708 = vadd.xlane.f32.xlu0 %v707
        %v709 = vpop.xlane.xlu0 %708
        %v710 = vadd.f32 %v702, %v703
        %711 = vadd.xlane.f32.xlu0 %v710
        %v712 = vpop.xlane.xlu0 %711
        %vm713 = vcmask 195584
        %v715 = vsel %vm713, %v686, 0
        %v718 = vsel %vm713, %v687, 0
        %v721 = vsel %vm713, %v688, 0
        %723 = vmatprep.subr.mxu0 0.0
        %724 = vmatpush1.msra.mxu0 0.0
        %725 = vmatprep.subr.mxu0 0.0
        %726 = vmatpush1.msra.mxu0 0.0
        %727 = vmatprep.subr.mxu0 0.0
        %728 = vmatpush1.msra.mxu0 0.0
        %729 = vmatprep.subr.mxu0 0.0
        %730 = vmatpush1.msra.mxu0 0.0
        %731 = vmatprep.subr.mxu0 0.0
        %732 = vmatpush1.msra.mxu0 0.0
        %733 = vmatprep.subr.mxu0 0.0
        %734 = vmatpush1.msra.mxu0 0.0
        %735 = vmatprep.subr.mxu0 0.0
        %736 = vmatpush1.msra.mxu0 0.0
        %737 = vmatprep.subr.mxu0 0.0
        %738 = vmatpush1.msra.mxu0 0.0
        %739 = vmatprep.subr.mxu0 0.0
        %740 = vmatpush1.msra.mxu0 0.0
        %741 = vmatprep.subr.mxu0 0.0
        %742 = vmatpush1.msra.mxu0 0.0
        %743 = vmatprep.subr.mxu0 0.0
        %744 = vmatpush1.msra.mxu0 0.0
        %745 = vmatprep.subr.mxu0 0.0
        %746 = vmatpush1.msra.mxu0 0.0
        %747 = vmatprep.subr.mxu0 0.0
        %748 = vmatpush1.msra.mxu0 0.0
        %749 = vmatprep.subr.mxu0 0.0
        %750 = vmatpush1.msra.mxu0 %v697
        %751 = vmatprep.subr.mxu0 0.0
        %752 = vmatpush1.msra.mxu0 %v694
        %753 = vmatprep.subr.mxu0 0.0
        %754 = vmatpush1.msra.mxu0 %v691
        %755 = vmatprep.subr.mxu0 0.0
        %756 = vmatpush2.msra.mxu0 0.0
        %757 = vmatprep.subr.mxu0 0.0
        %758 = vmatpush2.msra.mxu0 0.0
        %759 = vmatprep.subr.mxu0 0.0
        %760 = vmatpush2.msra.mxu0 0.0
        %761 = vmatprep.subr.mxu0 0.0
        %762 = vmatpush2.msra.mxu0 0.0
        %763 = vmatprep.subr.mxu0 0.0
        %764 = vmatpush2.msra.mxu0 0.0
        %765 = vmatprep.subr.mxu0 0.0
        %766 = vmatpush2.msra.mxu0 0.0
        %767 = vmatprep.subr.mxu0 0.0
        %768 = vmatpush2.msra.mxu0 0.0
        %769 = vmatprep.subr.mxu0 0.0
        %770 = vmatpush2.msra.mxu0 0.0
        %771 = vmatprep.subr.mxu0 0.0
        %772 = vmatpush2.msra.mxu0 0.0
        %773 = vmatprep.subr.mxu0 0.0
        %774 = vmatpush2.msra.mxu0 0.0
        %775 = vmatprep.subr.mxu0 0.0
        %776 = vmatpush2.msra.mxu0 0.0
        %777 = vmatprep.subr.mxu0 0.0
        %778 = vmatpush2.msra.mxu0 0.0
        %779 = vmatprep.subr.mxu0 0.0
        %780 = vmatpush2.msra.mxu0 0.0
        %781 = vmatprep.subr.mxu0 0.0
        %782 = vmatpush2.msra.mxu0 0.0
        %783 = vmatprep.subr.mxu0 0.0
        %784 = vmatpush2.msra.mxu0 0.0
        %785 = vmatprep.subr.mxu0 0.0
        %786 = vmatpush2.msra.mxu0 0.0
        %787 = vmatprep.mubr.f32.mxu0 0.0
        %788 = vmatmul.mubr.f32.gmra.mxu0 %v715
        %v789 = vpop.f32.mrf.mxu0
        %v790 = vadd.f32 0.0, %v789
        %v791 = vpop.f32.mrf.mxu0
        %792 = vmatprep.mubr.f32.mxu0 0.0
        %793 = vmatmul.mubr.f32.gmra.mxu0 %v718
        %v794 = vpop.f32.mrf.mxu0
        %v795 = vadd.f32 0.0, %v794
        %v796 = vpop.f32.mrf.mxu0
        %797 = vmatprep.mubr.f32.mxu0 0.0
        %798 = vmatmul.mubr.f32.gmra.mxu0 %v721
        %v799 = vpop.f32.mrf.mxu0
        %v800 = vadd.f32 0.0, %v799
        %v801 = vpop.f32.mrf.mxu0
        %802 = vdwg.mxu0
        %v803 = vmul.f32 %v790, 0.00078125
        %v804 = vmul.f32 %v795, 0.00078125
        %v805 = vmul.f32 %v800, 0.00078125
        %806 = vmatprep.subr.mxu0 0.0
        %807 = vmatpush1.msra.mxu0 0.0
        %808 = vmatprep.subr.mxu0 0.0
        %809 = vmatpush1.msra.mxu0 0.0
        %810 = vmatprep.subr.mxu0 0.0
        %811 = vmatpush1.msra.mxu0 0.0
        %812 = vmatprep.subr.mxu0 0.0
        %813 = vmatpush1.msra.mxu0 0.0
        %814 = vmatprep.subr.mxu0 0.0
        %815 = vmatpush1.msra.mxu0 0.0
        %816 = vmatprep.subr.mxu0 0.0
        %817 = vmatpush1.msra.mxu0 0.0
        %818 = vmatprep.subr.mxu0 0.0
        %819 = vmatpush1.msra.mxu0 0.0
        %820 = vmatprep.subr.mxu0 0.0
        %821 = vmatpush1.msra.mxu0 0.0
        %822 = vmatprep.subr.mxu0 0.0
        %823 = vmatpush1.msra.mxu0 0.0
        %824 = vmatprep.subr.mxu0 0.0
        %825 = vmatpush1.msra.mxu0 0.0
        %826 = vmatprep.subr.mxu0 0.0
        %827 = vmatpush1.msra.mxu0 0.0
        %828 = vmatprep.subr.mxu0 0.0
        %829 = vmatpush1.msra.mxu0 0.0
        %830 = vmatprep.subr.mxu0 0.0
        %831 = vmatpush1.msra.mxu0 0.0
        %832 = vmatprep.subr.mxu0 0.0
        %833 = vmatpush1.msra.mxu0 %v712
        %834 = vmatprep.subr.mxu0 0.0
        %835 = vmatpush1.msra.mxu0 %v709
        %836 = vmatprep.subr.mxu0 0.0
        %837 = vmatpush1.msra.mxu0 %v706
        %838 = vmatprep.subr.mxu0 0.0
        %839 = vmatpush2.msra.mxu0 0.0
        %840 = vmatprep.subr.mxu0 0.0
        %841 = vmatpush2.msra.mxu0 0.0
        %842 = vmatprep.subr.mxu0 0.0
        %843 = vmatpush2.msra.mxu0 0.0
        %844 = vmatprep.subr.mxu0 0.0
        %845 = vmatpush2.msra.mxu0 0.0
        %846 = vmatprep.subr.mxu0 0.0
        %847 = vmatpush2.msra.mxu0 0.0
        %848 = vmatprep.subr.mxu0 0.0
        %849 = vmatpush2.msra.mxu0 0.0
        %850 = vmatprep.subr.mxu0 0.0
        %851 = vmatpush2.msra.mxu0 0.0
        %852 = vmatprep.subr.mxu0 0.0
        %853 = vmatpush2.msra.mxu0 0.0
        %854 = vmatprep.subr.mxu0 0.0
        %855 = vmatpush2.msra.mxu0 0.0
        %856 = vmatprep.subr.mxu0 0.0
        %857 = vmatpush2.msra.mxu0 0.0
        %858 = vmatprep.subr.mxu0 0.0
        %859 = vmatpush2.msra.mxu0 0.0
        %860 = vmatprep.subr.mxu0 0.0
        %861 = vmatpush2.msra.mxu0 0.0
        %862 = vmatprep.subr.mxu0 0.0
        %863 = vmatpush2.msra.mxu0 0.0
        %864 = vmatprep.subr.mxu0 0.0
        %865 = vmatpush2.msra.mxu0 0.0
        %866 = vmatprep.subr.mxu0 0.0
        %867 = vmatpush2.msra.mxu0 0.0
        %868 = vmatprep.subr.mxu0 0.0
        %869 = vmatpush2.msra.mxu0 0.0
        %870 = vmatprep.mubr.f32.mxu0 0.0
        %871 = vmatmul.mubr.f32.gmra.mxu0 %v715
        %v872 = vpop.f32.mrf.mxu0
        %v873 = vadd.f32 0.0, %v872
        %v874 = vpop.f32.mrf.mxu0
        %875 = vmatprep.mubr.f32.mxu0 0.0
        %876 = vmatmul.mubr.f32.gmra.mxu0 %v718
        %v877 = vpop.f32.mrf.mxu0
        %v878 = vadd.f32 0.0, %v877
        %v879 = vpop.f32.mrf.mxu0
        %880 = vmatprep.mubr.f32.mxu0 0.0
        %881 = vmatmul.mubr.f32.gmra.mxu0 %v721
        %v882 = vpop.f32.mrf.mxu0
        %v883 = vadd.f32 0.0, %v882
        %v884 = vpop.f32.mrf.mxu0
        %885 = vdwg.mxu0
        %v886 = vmul.f32 %v873, 0.00078125
        %v887 = vmul.f32 %v878, 0.00078125
        %v888 = vmul.f32 %v883, 0.00078125
        %v889 = vmul.f32 %v803, %v803
        %v890 = vmul.f32 %v804, %v804
        %v891 = vmul.f32 %v805, %v805
        %v892 = vsub.f32 %v886, %v889
        %v893 = vsub.f32 %v887, %v890
        %v894 = vsub.f32 %v888, %v891
        %896 = vset.pattern.permute.xlu0 0
        %897 = vperm.xlu0 %896, %v803
        %v898 = vpop.permute.xlu0 %897
        %901 = vset.pattern.permute.xlu0 0
        %902 = vperm.xlu0 %901, %v804
        %v903 = vpop.permute.xlu0 %902
        %906 = vset.pattern.permute.xlu0 0
        %907 = vperm.xlu0 %906, %v805
        %v908 = vpop.permute.xlu0 %907
        %v910 = vsub.f32 %v664, %v898
        %v911 = vsub.f32 %v666, %v898
        %v912 = vsub.f32 %v670, %v903
        %v913 = vsub.f32 %v672, %v903
        %v914 = vsub.f32 %v676, %v908
        %v915 = vsub.f32 %v678, %v908
        %v916 = vadd.f32 %v892, 1e-05
        %v917 = vadd.f32 %v893, 1e-05
        %v918 = vadd.f32 %v894, 1e-05
        %v919 = vrsqrt.pop %v916
        %v920 = vrsqrt.pop %v917
        %v921 = vrsqrt.pop %v918
        %v922 = vmul.f32 %v919, %v680
        %v923 = vmul.f32 %v920, %v681
        %v924 = vmul.f32 %v921, %v682
        %926 = vset.pattern.permute.xlu0 0
        %927 = vperm.xlu0 %926, %v922
        %v928 = vpop.permute.xlu0 %927
        %931 = vset.pattern.permute.xlu0 0
        %932 = vperm.xlu0 %931, %v923
        %v933 = vpop.permute.xlu0 %932
        %936 = vset.pattern.permute.xlu0 0
        %937 = vperm.xlu0 %936, %v924
        %v938 = vpop.permute.xlu0 %937
        %v940 = vmul.f32 %v910, %v928
        %v941 = vmul.f32 %v911, %v928
        %v942 = vmul.f32 %v912, %v933
        %v943 = vmul.f32 %v913, %v933
        %v944 = vmul.f32 %v914, %v938
        %v945 = vmul.f32 %v915, %v938
        %947 = vset.pattern.permute.xlu0 0
        %948 = vperm.xlu0 %947, %v683
        %v949 = vpop.permute.xlu0 %948
        %952 = vset.pattern.permute.xlu0 0
        %953 = vperm.xlu0 %952, %v684
        %v954 = vpop.permute.xlu0 %953
        %957 = vset.pattern.permute.xlu0 0
        %958 = vperm.xlu0 %957, %v685
        %v959 = vpop.permute.xlu0 %958
        %v961 = vadd.f32 %v940, %v949
        %v962 = vadd.f32 %v941, %v949
        %v963 = vadd.f32 %v942, %v954
        %v964 = vadd.f32 %v943, %v954
        %v965 = vadd.f32 %v944, %v959
        %v966 = vadd.f32 %v945, %v959
        %v967 = vmax.f32 %v961, 0.0
        %v968 = vmax.f32 %v962, 0.0
        %v969 = vmax.f32 %v963, 0.0
        %v970 = vmax.f32 %v964, 0.0
        %v971 = vmax.f32 %v965, 0.0
        %v972 = vmax.f32 %v966, 0.0
        %v973 = vld [vmem:[#allocation5] sm:$0xff]
        %v974 = vld [vmem:[#allocation5 + $0x8] sm:$0xff]
        %975 = vrot.lane.b32.xlu0 %v967, 17
        %v976 = vpop.permute.xlu0 %975
        %977 = vrot.lane.b32.xlu0 %v969, 17
        %v978 = vpop.permute.xlu0 %977
        %979 = vrot.lane.b32.xlu0 %v971, 17
        %v980 = vpop.permute.xlu0 %979
        %981 = vrot.lane.b32.xlu0 %v968, 17
        %v982 = vpop.permute.xlu0 %981
        %983 = vrot.lane.b32.xlu0 %v970, 17
        %v984 = vpop.permute.xlu0 %983
        %985 = vrot.lane.b32.xlu0 %v972, 17
        %v986 = vpop.permute.xlu0 %985
        %v987 = vsel %vm455, %v976, %v982
        %v988 = vsel %vm455, %v978, %v984
        %v989 = vsel %vm455, %v980, %v986
        %v990 = vsel %vm455, %v982, %v976
        %v991 = vsel %vm455, %v984, %v978
        %v992 = vsel %vm455, %v986, %v980
        %v993 = vmul.f32 %v990, %v461
        %v994 = vmul.f32 %v987, %v465
        %v995 = vmul.f32 %v991, %v461
        %v996 = vmul.f32 %v988, %v465
        %v997 = vmul.f32 %v992, %v461
        %v998 = vmul.f32 %v989, %v465
        %999 = vrot.lane.b32.xlu0 %v967, 16
        %v1000 = vpop.permute.xlu0 %999
        %1001 = vrot.lane.b32.xlu0 %v969, 16
        %v1002 = vpop.permute.xlu0 %1001
        %1003 = vrot.lane.b32.xlu0 %v971, 16
        %v1004 = vpop.permute.xlu0 %1003
        %1005 = vrot.lane.b32.xlu0 %v968, 16
        %v1006 = vpop.permute.xlu0 %1005
        %1007 = vrot.lane.b32.xlu0 %v970, 16
        %v1008 = vpop.permute.xlu0 %1007
        %1009 = vrot.lane.b32.xlu0 %v972, 16
        %v1010 = vpop.permute.xlu0 %1009
        %v1011 = vsel %vm472, %v1000, %v1006
        %v1012 = vsel %vm472, %v1002, %v1008
        %v1013 = vsel %vm472, %v1004, %v1010
        %v1014 = vsel %vm472, %v1006, %v1000
        %v1015 = vsel %vm472, %v1008, %v1002
        %v1016 = vsel %vm472, %v1010, %v1004
        %v1017 = vmul.f32 %v1014, %v478
        %v1018 = vmul.f32 %v1011, %v482
        %v1019 = vmul.f32 %v1015, %v478
        %v1020 = vmul.f32 %v1012, %v482
        %v1021 = vmul.f32 %v1016, %v478
        %v1022 = vmul.f32 %v1013, %v482
        %1023 = vrot.lane.b32.xlu0 %v967, 15
        %v1024 = vpop.permute.xlu0 %1023
        %1025 = vrot.lane.b32.xlu0 %v969, 15
        %v1026 = vpop.permute.xlu0 %1025
        %1027 = vrot.lane.b32.xlu0 %v971, 15
        %v1028 = vpop.permute.xlu0 %1027
        %1029 = vrot.lane.b32.xlu0 %v968, 15
        %v1030 = vpop.permute.xlu0 %1029
        %1031 = vrot.lane.b32.xlu0 %v970, 15
        %v1032 = vpop.permute.xlu0 %1031
        %1033 = vrot.lane.b32.xlu0 %v972, 15
        %v1034 = vpop.permute.xlu0 %1033
        %v1035 = vsel %vm489, %v1024, %v1030
        %v1036 = vsel %vm489, %v1026, %v1032
        %v1037 = vsel %vm489, %v1028, %v1034
        %v1038 = vsel %vm489, %v1030, %v1024
        %v1039 = vsel %vm489, %v1032, %v1026
        %v1040 = vsel %vm489, %v1034, %v1028
        %v1041 = vmul.f32 %v1038, %v495
        %v1042 = vmul.f32 %v1035, %v499
        %v1043 = vmul.f32 %v1039, %v495
        %v1044 = vmul.f32 %v1036, %v499
        %v1045 = vmul.f32 %v1040, %v495
        %v1046 = vmul.f32 %v1037, %v499
        %1047 = vrot.lane.b32.xlu0 %v967, 1
        %v1048 = vpop.permute.xlu0 %1047
        %1049 = vrot.lane.b32.xlu0 %v969, 1
        %v1050 = vpop.permute.xlu0 %1049
        %1051 = vrot.lane.b32.xlu0 %v971, 1
        %v1052 = vpop.permute.xlu0 %1051
        %1053 = vrot.lane.b32.xlu0 %v968, 1
        %v1054 = vpop.permute.xlu0 %1053
        %1055 = vrot.lane.b32.xlu0 %v970, 1
        %v1056 = vpop.permute.xlu0 %1055
        %1057 = vrot.lane.b32.xlu0 %v972, 1
        %v1058 = vpop.permute.xlu0 %1057
        %v1059 = vsel %vm506, %v1048, %v1054
        %v1060 = vsel %vm506, %v1050, %v1056
        %v1061 = vsel %vm506, %v1052, %v1058
        %v1062 = vsel %vm506, %v1054, %v1048
        %v1063 = vsel %vm506, %v1056, %v1050
        %v1064 = vsel %vm506, %v1058, %v1052
        %v1065 = vmul.f32 %v1062, %v512
        %v1066 = vmul.f32 %v1059, %v516
        %v1067 = vmul.f32 %v1063, %v512
        %v1068 = vmul.f32 %v1060, %v516
        %v1069 = vmul.f32 %v1064, %v512
        %v1070 = vmul.f32 %v1061, %v516
        %1071 = vrot.lane.b32.xlu0 %v967, 127
        %v1072 = vpop.permute.xlu0 %1071
        %1073 = vrot.lane.b32.xlu0 %v969, 127
        %v1074 = vpop.permute.xlu0 %1073
        %1075 = vrot.lane.b32.xlu0 %v971, 127
        %v1076 = vpop.permute.xlu0 %1075
        %1077 = vrot.lane.b32.xlu0 %v968, 127
        %v1078 = vpop.permute.xlu0 %1077
        %1079 = vrot.lane.b32.xlu0 %v970, 127
        %v1080 = vpop.permute.xlu0 %1079
        %1081 = vrot.lane.b32.xlu0 %v972, 127
        %v1082 = vpop.permute.xlu0 %1081
        %v1083 = vsel %vm523, %v1072, %v1078
        %v1084 = vsel %vm523, %v1074, %v1080
        %v1085 = vsel %vm523, %v1076, %v1082
        %v1086 = vsel %vm523, %v1078, %v1072
        %v1087 = vsel %vm523, %v1080, %v1074
        %v1088 = vsel %vm523, %v1082, %v1076
        %v1089 = vmul.f32 %v1083, %v529
        %v1090 = vmul.f32 %v1086, %v533
        %v1091 = vmul.f32 %v1084, %v529
        %v1092 = vmul.f32 %v1087, %v533
        %v1093 = vmul.f32 %v1085, %v529
        %v1094 = vmul.f32 %v1088, %v533
        %1095 = vrot.lane.b32.xlu0 %v967, 113
        %v1096 = vpop.permute.xlu0 %1095
        %1097 = vrot.lane.b32.xlu0 %v969, 113
        %v1098 = vpop.permute.xlu0 %1097
        %1099 = vrot.lane.b32.xlu0 %v971, 113
        %v1100 = vpop.permute.xlu0 %1099
        %1101 = vrot.lane.b32.xlu0 %v968, 113
        %v1102 = vpop.permute.xlu0 %1101
        %1103 = vrot.lane.b32.xlu0 %v970, 113
        %v1104 = vpop.permute.xlu0 %1103
        %1105 = vrot.lane.b32.xlu0 %v972, 113
        %v1106 = vpop.permute.xlu0 %1105
        %v1107 = vsel %vm540, %v1096, %v1102
        %v1108 = vsel %vm540, %v1098, %v1104
        %v1109 = vsel %vm540, %v1100, %v1106
        %v1110 = vsel %vm540, %v1102, %v1096
        %v1111 = vsel %vm540, %v1104, %v1098
        %v1112 = vsel %vm540, %v1106, %v1100
        %v1113 = vmul.f32 %v1107, %v546
        %v1114 = vmul.f32 %v1110, %v550
        %v1115 = vmul.f32 %v1108, %v546
        %v1116 = vmul.f32 %v1111, %v550
        %v1117 = vmul.f32 %v1109, %v546
        %v1118 = vmul.f32 %v1112, %v550
        %1119 = vrot.lane.b32.xlu0 %v967, 112
        %v1120 = vpop.permute.xlu0 %1119
        %1121 = vrot.lane.b32.xlu0 %v969, 112
        %v1122 = vpop.permute.xlu0 %1121
        %1123 = vrot.lane.b32.xlu0 %v971, 112
        %v1124 = vpop.permute.xlu0 %1123
        %1125 = vrot.lane.b32.xlu0 %v968, 112
        %v1126 = vpop.permute.xlu0 %1125
        %1127 = vrot.lane.b32.xlu0 %v970, 112
        %v1128 = vpop.permute.xlu0 %1127
        %1129 = vrot.lane.b32.xlu0 %v972, 112
        %v1130 = vpop.permute.xlu0 %1129
        %v1131 = vsel %vm557, %v1120, %v1126
        %v1132 = vsel %vm557, %v1122, %v1128
        %v1133 = vsel %vm557, %v1124, %v1130
        %v1134 = vsel %vm557, %v1126, %v1120
        %v1135 = vsel %vm557, %v1128, %v1122
        %v1136 = vsel %vm557, %v1130, %v1124
        %v1137 = vmul.f32 %v1131, %v563
        %v1138 = vmul.f32 %v1134, %v567
        %v1139 = vmul.f32 %v1132, %v563
        %v1140 = vmul.f32 %v1135, %v567
        %v1141 = vmul.f32 %v1133, %v563
        %v1142 = vmul.f32 %v1136, %v567
        %1143 = vrot.lane.b32.xlu0 %v967, 111
        %v1144 = vpop.permute.xlu0 %1143
        %1145 = vrot.lane.b32.xlu0 %v969, 111
        %v1146 = vpop.permute.xlu0 %1145
        %1147 = vrot.lane.b32.xlu0 %v971, 111
        %v1148 = vpop.permute.xlu0 %1147
        %1149 = vrot.lane.b32.xlu0 %v968, 111
        %v1150 = vpop.permute.xlu0 %1149
        %1151 = vrot.lane.b32.xlu0 %v970, 111
        %v1152 = vpop.permute.xlu0 %1151
        %1153 = vrot.lane.b32.xlu0 %v972, 111
        %v1154 = vpop.permute.xlu0 %1153
        %v1155 = vsel %vm574, %v1144, %v1150
        %v1156 = vsel %vm574, %v1146, %v1152
        %v1157 = vsel %vm574, %v1148, %v1154
        %v1158 = vsel %vm574, %v1150, %v1144
        %v1159 = vsel %vm574, %v1152, %v1146
        %v1160 = vsel %vm574, %v1154, %v1148
        %v1161 = vmul.f32 %v1155, %v580
        %v1162 = vmul.f32 %v1158, %v584
        %v1163 = vmul.f32 %v1156, %v580
        %v1164 = vmul.f32 %v1159, %v584
        %v1165 = vmul.f32 %v1157, %v580
        %v1166 = vmul.f32 %v1160, %v584
        %vm1167 = vcmask 719872
        %v1169 = vsel %vm1167, %v974, 0
        %1171 = vmatprep.subr.mxu0 %v1090
        %1172 = vmatpush1.msra.mxu0 %v1089
        %1173 = vmatprep.subr.mxu0 %v972
        %1174 = vmatpush1.msra.mxu0 %v971
        %1175 = vmatprep.subr.mxu0 %v970
        %1176 = vmatpush1.msra.mxu0 %v969
        %1177 = vmatprep.subr.mxu0 %v968
        %1178 = vmatpush1.msra.mxu0 %v967
        %1179 = vmatprep.subr.mxu0 %v1070
        %1180 = vmatpush1.msra.mxu0 %v1069
        %1181 = vmatprep.subr.mxu0 %v1068
        %1182 = vmatpush1.msra.mxu0 %v1067
        %1183 = vmatprep.subr.mxu0 %v1066
        %1184 = vmatpush1.msra.mxu0 %v1065
        %1185 = vmatprep.subr.mxu0 %v1046
        %1186 = vmatpush1.msra.mxu0 %v1045
        %1187 = vmatprep.subr.mxu0 %v1044
        %1188 = vmatpush1.msra.mxu0 %v1043
        %1189 = vmatprep.subr.mxu0 %v1042
        %1190 = vmatpush1.msra.mxu0 %v1041
        %1191 = vmatprep.subr.mxu0 %v1022
        %1192 = vmatpush1.msra.mxu0 %v1021
        %1193 = vmatprep.subr.mxu0 %v1020
        %1194 = vmatpush1.msra.mxu0 %v1019
        %1195 = vmatprep.subr.mxu0 %v1018
        %1196 = vmatpush1.msra.mxu0 %v1017
        %1197 = vmatprep.subr.mxu0 %v998
        %1198 = vmatpush1.msra.mxu0 %v997
        %1199 = vmatprep.subr.mxu0 %v996
        %1200 = vmatpush1.msra.mxu0 %v995
        %1201 = vmatprep.subr.mxu0 %v994
        %1202 = vmatpush1.msra.mxu0 %v993
        %1203 = vmatprep.subr.mxu0 0.0
        %1204 = vmatpush2.msra.mxu0 0.0
        %1205 = vmatprep.subr.mxu0 0.0
        %1206 = vmatpush2.msra.mxu0 0.0
        %1207 = vmatprep.subr.mxu0 0.0
        %1208 = vmatpush2.msra.mxu0 0.0
        %1209 = vmatprep.subr.mxu0 0.0
        %1210 = vmatpush2.msra.mxu0 0.0
        %1211 = vmatprep.subr.mxu0 0.0
        %1212 = vmatpush2.msra.mxu0 0.0
        %1213 = vmatprep.subr.mxu0 %v1166
        %1214 = vmatpush2.msra.mxu0 %v1165
        %1215 = vmatprep.subr.mxu0 %v1164
        %1216 = vmatpush2.msra.mxu0 %v1163
        %1217 = vmatprep.subr.mxu0 %v1162
        %1218 = vmatpush2.msra.mxu0 %v1161
        %1219 = vmatprep.subr.mxu0 %v1142
        %1220 = vmatpush2.msra.mxu0 %v1141
        %1221 = vmatprep.subr.mxu0 %v1140
        %1222 = vmatpush2.msra.mxu0 %v1139
        %1223 = vmatprep.subr.mxu0 %v1138
        %1224 = vmatpush2.msra.mxu0 %v1137
        %1225 = vmatprep.subr.mxu0 %v1118
        %1226 = vmatpush2.msra.mxu0 %v1117
        %1227 = vmatprep.subr.mxu0 %v1116
        %1228 = vmatpush2.msra.mxu0 %v1115
        %1229 = vmatprep.subr.mxu0 %v1114
        %1230 = vmatpush2.msra.mxu0 %v1113
        %1231 = vmatprep.subr.mxu0 %v1094
        %1232 = vmatpush2.msra.mxu0 %v1093
        %1233 = vmatprep.subr.mxu0 %v1092
        %1234 = vmatpush2.msra.mxu0 %v1091
        %1235 = vmatprep.mubr.f32.mxu0 %v1169
        %1236 = vmatmul.mubr.f32.gmra.mxu0 %v973
        %v1237 = vpop.f32.mrf.mxu0
        %v1238 = vadd.f32 0.0, %v1237
        %v1239 = vpop.f32.mrf.mxu0
        %v1240 = vadd.f32 0.0, %v1239
        %1241 = vdwg.mxu0
        %v1242 = vld [vmem:[%s5] sm:$0xff]
        %v1243 = vld [vmem:[%s6] sm:$0xff]
        %v1244 = vld [vmem:[%s10] sm:$0xff]
        %v1245 = vadd.f32 %v1238, %v1240
        %1246 = vadd.xlane.f32.xlu0 %v1245
        %v1247 = vpop.xlane.xlu0 %1246
        %v1248 = vmul.f32 %v1238, %v1238
        %v1249 = vmul.f32 %v1240, %v1240
        %v1250 = vadd.f32 %v1248, %v1249
        %1251 = vadd.xlane.f32.xlu0 %v1250
        %v1252 = vpop.xlane.xlu0 %1251
        %vm1253 = vcmask 64512
        %v1255 = vsel %vm1253, %v1244, 0
        %1257 = vmatprep.subr.mxu0 0.0
        %1258 = vmatpush1.msra.mxu0 0.0
        %1259 = vmatprep.subr.mxu0 0.0
        %1260 = vmatpush1.msra.mxu0 0.0
        %1261 = vmatprep.subr.mxu0 0.0
        %1262 = vmatpush1.msra.mxu0 0.0
        %1263 = vmatprep.subr.mxu0 0.0
        %1264 = vmatpush1.msra.mxu0 0.0
        %1265 = vmatprep.subr.mxu0 0.0
        %1266 = vmatpush1.msra.mxu0 0.0
        %1267 = vmatprep.subr.mxu0 0.0
        %1268 = vmatpush1.msra.mxu0 0.0
        %1269 = vmatprep.subr.mxu0 0.0
        %1270 = vmatpush1.msra.mxu0 0.0
        %1271 = vmatprep.subr.mxu0 0.0
        %1272 = vmatpush1.msra.mxu0 0.0
        %1273 = vmatprep.subr.mxu0 0.0
        %1274 = vmatpush1.msra.mxu0 0.0
        %1275 = vmatprep.subr.mxu0 0.0
        %1276 = vmatpush1.msra.mxu0 0.0
        %1277 = vmatprep.subr.mxu0 0.0
        %1278 = vmatpush1.msra.mxu0 0.0
        %1279 = vmatprep.subr.mxu0 0.0
        %1280 = vmatpush1.msra.mxu0 0.0
        %1281 = vmatprep.subr.mxu0 0.0
        %1282 = vmatpush1.msra.mxu0 0.0
        %1283 = vmatprep.subr.mxu0 0.0
        %1284 = vmatpush1.msra.mxu0 0.0
        %1285 = vmatprep.subr.mxu0 0.0
        %1286 = vmatpush1.msra.mxu0 0.0
        %1287 = vmatprep.subr.mxu0 0.0
        %1288 = vmatpush1.msra.mxu0 %v1247
        %1289 = vmatprep.subr.mxu0 0.0
        %1290 = vmatpush2.msra.mxu0 0.0
        %1291 = vmatprep.subr.mxu0 0.0
        %1292 = vmatpush2.msra.mxu0 0.0
        %1293 = vmatprep.subr.mxu0 0.0
        %1294 = vmatpush2.msra.mxu0 0.0
        %1295 = vmatprep.subr.mxu0 0.0
        %1296 = vmatpush2.msra.mxu0 0.0
        %1297 = vmatprep.subr.mxu0 0.0
        %1298 = vmatpush2.msra.mxu0 0.0
        %1299 = vmatprep.subr.mxu0 0.0
        %1300 = vmatpush2.msra.mxu0 0.0
        %1301 = vmatprep.subr.mxu0 0.0
        %1302 = vmatpush2.msra.mxu0 0.0
        %1303 = vmatprep.subr.mxu0 0.0
        %1304 = vmatpush2.msra.mxu0 0.0
        %1305 = vmatprep.subr.mxu0 0.0
        %1306 = vmatpush2.msra.mxu0 0.0
        %1307 = vmatprep.subr.mxu0 0.0
        %1308 = vmatpush2.msra.mxu0 0.0
        %1309 = vmatprep.subr.mxu0 0.0
        %1310 = vmatpush2.msra.mxu0 0.0
        %1311 = vmatprep.subr.mxu0 0.0
        %1312 = vmatpush2.msra.mxu0 0.0
        %1313 = vmatprep.subr.mxu0 0.0
        %1314 = vmatpush2.msra.mxu0 0.0
        %1315 = vmatprep.subr.mxu0 0.0
        %1316 = vmatpush2.msra.mxu0 0.0
        %1317 = vmatprep.subr.mxu0 0.0
        %1318 = vmatpush2.msra.mxu0 0.0
        %1319 = vmatprep.subr.mxu0 0.0
        %1320 = vmatpush2.msra.mxu0 0.0
        %1321 = vmatprep.mubr.f32.mxu0 0.0
        %1322 = vmatmul.mubr.f32.gmra.mxu0 %v1255
        %v1323 = vpop.f32.mrf.mxu0
        %v1324 = vadd.f32 0.0, %v1323
        %v1325 = vpop.f32.mrf.mxu0
        %1326 = vdwg.mxu0
        %v1327 = vmul.f32 %v1324, 0.00390625
        %1328 = vmatprep.subr.mxu0 0.0
        %1329 = vmatpush1.msra.mxu0 0.0
        %1330 = vmatprep.subr.mxu0 0.0
        %1331 = vmatpush1.msra.mxu0 0.0
        %1332 = vmatprep.subr.mxu0 0.0
        %1333 = vmatpush1.msra.mxu0 0.0
        %1334 = vmatprep.subr.mxu0 0.0
        %1335 = vmatpush1.msra.mxu0 0.0
        %1336 = vmatprep.subr.mxu0 0.0
        %1337 = vmatpush1.msra.mxu0 0.0
        %1338 = vmatprep.subr.mxu0 0.0
        %1339 = vmatpush1.msra.mxu0 0.0
        %1340 = vmatprep.subr.mxu0 0.0
        %1341 = vmatpush1.msra.mxu0 0.0
        %1342 = vmatprep.subr.mxu0 0.0
        %1343 = vmatpush1.msra.mxu0 0.0
        %1344 = vmatprep.subr.mxu0 0.0
        %1345 = vmatpush1.msra.mxu0 0.0
        %1346 = vmatprep.subr.mxu0 0.0
        %1347 = vmatpush1.msra.mxu0 0.0
        %1348 = vmatprep.subr.mxu0 0.0
        %1349 = vmatpush1.msra.mxu0 0.0
        %1350 = vmatprep.subr.mxu0 0.0
        %1351 = vmatpush1.msra.mxu0 0.0
        %1352 = vmatprep.subr.mxu0 0.0
        %1353 = vmatpush1.msra.mxu0 0.0
        %1354 = vmatprep.subr.mxu0 0.0
        %1355 = vmatpush1.msra.mxu0 0.0
        %1356 = vmatprep.subr.mxu0 0.0
        %1357 = vmatpush1.msra.mxu0 0.0
        %1358 = vmatprep.subr.mxu0 0.0
        %1359 = vmatpush1.msra.mxu0 %v1252
        %1360 = vmatprep.subr.mxu0 0.0
        %1361 = vmatpush2.msra.mxu0 0.0
        %1362 = vmatprep.subr.mxu0 0.0
        %1363 = vmatpush2.msra.mxu0 0.0
        %1364 = vmatprep.subr.mxu0 0.0
        %1365 = vmatpush2.msra.mxu0 0.0
        %1366 = vmatprep.subr.mxu0 0.0
        %1367 = vmatpush2.msra.mxu0 0.0
        %1368 = vmatprep.subr.mxu0 0.0
        %1369 = vmatpush2.msra.mxu0 0.0
        %1370 = vmatprep.subr.mxu0 0.0
        %1371 = vmatpush2.msra.mxu0 0.0
        %1372 = vmatprep.subr.mxu0 0.0
        %1373 = vmatpush2.msra.mxu0 0.0
        %1374 = vmatprep.subr.mxu0 0.0
        %1375 = vmatpush2.msra.mxu0 0.0
        %1376 = vmatprep.subr.mxu0 0.0
        %1377 = vmatpush2.msra.mxu0 0.0
        %1378 = vmatprep.subr.mxu0 0.0
        %1379 = vmatpush2.msra.mxu0 0.0
        %1380 = vmatprep.subr.mxu0 0.0
        %1381 = vmatpush2.msra.mxu0 0.0
        %1382 = vmatprep.subr.mxu0 0.0
        %1383 = vmatpush2.msra.mxu0 0.0
        %1384 = vmatprep.subr.mxu0 0.0
        %1385 = vmatpush2.msra.mxu0 0.0
        %1386 = vmatprep.subr.mxu0 0.0
        %1387 = vmatpush2.msra.mxu0 0.0
        %1388 = vmatprep.subr.mxu0 0.0
        %1389 = vmatpush2.msra.mxu0 0.0
        %1390 = vmatprep.subr.mxu0 0.0
        %1391 = vmatpush2.msra.mxu0 0.0
        %1392 = vmatprep.mubr.f32.mxu0 0.0
        %1393 = vmatmul.mubr.f32.gmra.mxu0 %v1255
        %v1394 = vpop.f32.mrf.mxu0
        %v1395 = vadd.f32 0.0, %v1394
        %v1396 = vpop.f32.mrf.mxu0
        %1397 = vdwg.mxu0
        %v1398 = vmul.f32 %v1395, 0.00390625
        %v1399 = vmul.f32 %v1327, %v1327
        %v1400 = vsub.f32 %v1398, %v1399
        %1402 = vset.pattern.permute.xlu0 0
        %1403 = vperm.xlu0 %1402, %v1327
        %v1404 = vpop.permute.xlu0 %1403
        %v1406 = vsub.f32 %v1238, %v1404
        %v1407 = vsub.f32 %v1240, %v1404
        %v1408 = vadd.f32 %v1400, 1e-05
        %v1409 = vrsqrt.pop %v1408
        %v1410 = vmul.f32 %v1409, %v1242
        %1412 = vset.pattern.permute.xlu0 0
        %1413 = vperm.xlu0 %1412, %v1410
        %v1414 = vpop.permute.xlu0 %1413
        %v1416 = vmul.f32 %v1406, %v1414
        %v1417 = vmul.f32 %v1407, %v1414
        %1419 = vset.pattern.permute.xlu0 0
        %1420 = vperm.xlu0 %1419, %v1243
        %v1421 = vpop.permute.xlu0 %1420
        %v1423 = vadd.f32 %v1416, %v1421
        %v1424 = vadd.f32 %v1417, %v1421
        %v1425 = vadd.f32 %v1423, %v444
        %v1426 = vadd.f32 %v1424, %v445
        %v1427 = vmax.f32 %v1425, 0.0
        %v1428 = vmax.f32 %v1426, 0.0
        %v1429 = vld [vmem:[%s7] sm:$0xff]
        %v1430 = vld [vmem:[%s8] sm:$0xff]
        %v1431 = vadd.f32 %v1427, %v1428
        %1432 = vadd.xlane.f32.xlu0 %v1431
        %v1433 = vpop.xlane.xlu0 %1432
        %v1434 = vmul.f32 %v1427, %v1427
        %v1435 = vmul.f32 %v1428, %v1428
        %v1436 = vadd.f32 %v1434, %v1435
        %1437 = vadd.xlane.f32.xlu0 %v1436
        %v1438 = vpop.xlane.xlu0 %1437
        %1439 = vmatprep.subr.mxu0 0.0
        %1440 = vmatpush1.msra.mxu0 0.0
        %1441 = vmatprep.subr.mxu0 0.0
        %1442 = vmatpush1.msra.mxu0 0.0
        %1443 = vmatprep.subr.mxu0 0.0
        %1444 = vmatpush1.msra.mxu0 0.0
        %1445 = vmatprep.subr.mxu0 0.0
        %1446 = vmatpush1.msra.mxu0 0.0
        %1447 = vmatprep.subr.mxu0 0.0
        %1448 = vmatpush1.msra.mxu0 0.0
        %1449 = vmatprep.subr.mxu0 0.0
        %1450 = vmatpush1.msra.mxu0 0.0
        %1451 = vmatprep.subr.mxu0 0.0
        %1452 = vmatpush1.msra.mxu0 0.0
        %1453 = vmatprep.subr.mxu0 0.0
        %1454 = vmatpush1.msra.mxu0 0.0
        %1455 = vmatprep.subr.mxu0 0.0
        %1456 = vmatpush1.msra.mxu0 0.0
        %1457 = vmatprep.subr.mxu0 0.0
        %1458 = vmatpush1.msra.mxu0 0.0
        %1459 = vmatprep.subr.mxu0 0.0
        %1460 = vmatpush1.msra.mxu0 0.0
        %1461 = vmatprep.subr.mxu0 0.0
        %1462 = vmatpush1.msra.mxu0 0.0
        %1463 = vmatprep.subr.mxu0 0.0
        %1464 = vmatpush1.msra.mxu0 0.0
        %1465 = vmatprep.subr.mxu0 0.0
        %1466 = vmatpush1.msra.mxu0 0.0
        %1467 = vmatprep.subr.mxu0 0.0
        %1468 = vmatpush1.msra.mxu0 0.0
        %1469 = vmatprep.subr.mxu0 0.0
        %1470 = vmatpush1.msra.mxu0 %v1433
        %1471 = vmatprep.subr.mxu0 0.0
        %1472 = vmatpush2.msra.mxu0 0.0
        %1473 = vmatprep.subr.mxu0 0.0
        %1474 = vmatpush2.msra.mxu0 0.0
        %1475 = vmatprep.subr.mxu0 0.0
        %1476 = vmatpush2.msra.mxu0 0.0
        %1477 = vmatprep.subr.mxu0 0.0
        %1478 = vmatpush2.msra.mxu0 0.0
        %1479 = vmatprep.subr.mxu0 0.0
        %1480 = vmatpush2.msra.mxu0 0.0
        %1481 = vmatprep.subr.mxu0 0.0
        %1482 = vmatpush2.msra.mxu0 0.0
        %1483 = vmatprep.subr.mxu0 0.0
        %1484 = vmatpush2.msra.mxu0 0.0
        %1485 = vmatprep.subr.mxu0 0.0
        %1486 = vmatpush2.msra.mxu0 0.0
        %1487 = vmatprep.subr.mxu0 0.0
        %1488 = vmatpush2.msra.mxu0 0.0
        %1489 = vmatprep.subr.mxu0 0.0
        %1490 = vmatpush2.msra.mxu0 0.0
        %1491 = vmatprep.subr.mxu0 0.0
        %1492 = vmatpush2.msra.mxu0 0.0
        %1493 = vmatprep.subr.mxu0 0.0
        %1494 = vmatpush2.msra.mxu0 0.0
        %1495 = vmatprep.subr.mxu0 0.0
        %1496 = vmatpush2.msra.mxu0 0.0
        %1497 = vmatprep.subr.mxu0 0.0
        %1498 = vmatpush2.msra.mxu0 0.0
        %1499 = vmatprep.subr.mxu0 0.0
        %1500 = vmatpush2.msra.mxu0 0.0
        %1501 = vmatprep.subr.mxu0 0.0
        %1502 = vmatpush2.msra.mxu0 0.0
        %1503 = vmatprep.mubr.f32.mxu0 0.0
        %1504 = vmatmul.mubr.f32.gmra.mxu0 %v1255
        %v1505 = vpop.f32.mrf.mxu0
        %v1506 = vadd.f32 0.0, %v1505
        %v1507 = vpop.f32.mrf.mxu0
        %1508 = vdwg.mxu0
        %v1509 = vmul.f32 %v1506, 0.00390625
        %1510 = vmatprep.subr.mxu0 0.0
        %1511 = vmatpush1.msra.mxu0 0.0
        %1512 = vmatprep.subr.mxu0 0.0
        %1513 = vmatpush1.msra.mxu0 0.0
        %1514 = vmatprep.subr.mxu0 0.0
        %1515 = vmatpush1.msra.mxu0 0.0
        %1516 = vmatprep.subr.mxu0 0.0
        %1517 = vmatpush1.msra.mxu0 0.0
        %1518 = vmatprep.subr.mxu0 0.0
        %1519 = vmatpush1.msra.mxu0 0.0
        %1520 = vmatprep.subr.mxu0 0.0
        %1521 = vmatpush1.msra.mxu0 0.0
        %1522 = vmatprep.subr.mxu0 0.0
        %1523 = vmatpush1.msra.mxu0 0.0
        %1524 = vmatprep.subr.mxu0 0.0
        %1525 = vmatpush1.msra.mxu0 0.0
        %1526 = vmatprep.subr.mxu0 0.0
        %1527 = vmatpush1.msra.mxu0 0.0
        %1528 = vmatprep.subr.mxu0 0.0
        %1529 = vmatpush1.msra.mxu0 0.0
        %1530 = vmatprep.subr.mxu0 0.0
        %1531 = vmatpush1.msra.mxu0 0.0
        %1532 = vmatprep.subr.mxu0 0.0
        %1533 = vmatpush1.msra.mxu0 0.0
        %1534 = vmatprep.subr.mxu0 0.0
        %1535 = vmatpush1.msra.mxu0 0.0
        %1536 = vmatprep.subr.mxu0 0.0
        %1537 = vmatpush1.msra.mxu0 0.0
        %1538 = vmatprep.subr.mxu0 0.0
        %1539 = vmatpush1.msra.mxu0 0.0
        %1540 = vmatprep.subr.mxu0 0.0
        %1541 = vmatpush1.msra.mxu0 %v1438
        %1542 = vmatprep.subr.mxu0 0.0
        %1543 = vmatpush2.msra.mxu0 0.0
        %1544 = vmatprep.subr.mxu0 0.0
        %1545 = vmatpush2.msra.mxu0 0.0
        %1546 = vmatprep.subr.mxu0 0.0
        %1547 = vmatpush2.msra.mxu0 0.0
        %1548 = vmatprep.subr.mxu0 0.0
        %1549 = vmatpush2.msra.mxu0 0.0
        %1550 = vmatprep.subr.mxu0 0.0
        %1551 = vmatpush2.msra.mxu0 0.0
        %1552 = vmatprep.subr.mxu0 0.0
        %1553 = vmatpush2.msra.mxu0 0.0
        %1554 = vmatprep.subr.mxu0 0.0
        %1555 = vmatpush2.msra.mxu0 0.0
        %1556 = vmatprep.subr.mxu0 0.0
        %1557 = vmatpush2.msra.mxu0 0.0
        %1558 = vmatprep.subr.mxu0 0.0
        %1559 = vmatpush2.msra.mxu0 0.0
        %1560 = vmatprep.subr.mxu0 0.0
        %1561 = vmatpush2.msra.mxu0 0.0
        %1562 = vmatprep.subr.mxu0 0.0
        %1563 = vmatpush2.msra.mxu0 0.0
        %1564 = vmatprep.subr.mxu0 0.0
        %1565 = vmatpush2.msra.mxu0 0.0
        %1566 = vmatprep.subr.mxu0 0.0
        %1567 = vmatpush2.msra.mxu0 0.0
        %1568 = vmatprep.subr.mxu0 0.0
        %1569 = vmatpush2.msra.mxu0 0.0
        %1570 = vmatprep.subr.mxu0 0.0
        %1571 = vmatpush2.msra.mxu0 0.0
        %1572 = vmatprep.subr.mxu0 0.0
        %1573 = vmatpush2.msra.mxu0 0.0
        %1574 = vmatprep.mubr.f32.mxu0 0.0
        %1575 = vmatmul.mubr.f32.gmra.mxu0 %v1255
        %v1576 = vpop.f32.mrf.mxu0
        %v1577 = vadd.f32 0.0, %v1576
        %v1578 = vpop.f32.mrf.mxu0
        %1579 = vdwg.mxu0
        %v1580 = vmul.f32 %v1577, 0.00390625
        %v1581 = vmul.f32 %v1509, %v1509
        %v1582 = vsub.f32 %v1580, %v1581
        %1584 = vset.pattern.permute.xlu0 0
        %1585 = vperm.xlu0 %1584, %v1509
        %v1586 = vpop.permute.xlu0 %1585
        %v1588 = vsub.f32 %v1427, %v1586
        %v1589 = vsub.f32 %v1428, %v1586
        %v1590 = vadd.f32 %v1582, 1e-05
        %v1591 = vrsqrt.pop %v1590
        %v1592 = vmul.f32 %v1591, %v1429
        %1594 = vset.pattern.permute.xlu0 0
        %1595 = vperm.xlu0 %1594, %v1592
        %v1596 = vpop.permute.xlu0 %1595
        %v1598 = vmul.f32 %v1588, %v1596
        %v1599 = vmul.f32 %v1589, %v1596
        %1601 = vset.pattern.permute.xlu0 0
        %1602 = vperm.xlu0 %1601, %v1430
        %v1603 = vpop.permute.xlu0 %1602
        %v1605 = vadd.f32 %v1598, %v1603
        %v1606 = vadd.f32 %v1599, %v1603
        %1607 = vst [vmem:[%s434] sm:$0xff] %v1605
        %1608 = vst [vmem:[%s434 + $0x8] sm:$0xff] %v1606
        %s1609 = sand.u32 %s293, 1
        %s1610 = scalar_lea.sflag [#allocation4], %s1609
        %s1611 = sand.u32 %s293, 1
        %s1612 = smul.addr %s1611, 16
        %s1613 = scalar_lea.vmem [#allocation7], %s1612
        // Predicated region
        $region77: #{tpu_custom_call.1} parent=67 // pred_check
          %p1614 = pneg %p303
        $region78: #{tpu_custom_call.1} parent=67 // pred_check_branch
          %1616 = sbr.rel (%p1614) target = $region80
        $region79: #{tpu_custom_call.1} parent=67 // pred_region
          %s1618 = ssub.s32 256, 256
          %1619 = vsyncadd %s1610, %s1618
          %s1620 = smul.addr %s28, 2
          %s1621 = smul.addr %s1620, 128
          %s1622 = scalar_lea.hbm %s12, %s1621
          %s1624 = sshll.u32 %s1613, 4
          %s1625 = int_to_ptr.vmem [resolvable:$true] %s1624
          %1627 = dma.vmem_to_hbm [thread:$0]  %s1625, 256, %s1622, %s1610
        $region80: #{tpu_custom_call.1} parent=67 // pred_fallthru
          _
      $region68: #{tpu_custom_call.1} parent=5 // pred_fallthru
        _
      %p1628 = scmp.le.s32.totalorder 2, %s23
      // Predicated region
      $region81: #{tpu_custom_call.1} parent=5 // pred_check
        %p1629 = pneg %p1628
      $region82: #{tpu_custom_call.1} parent=5 // pred_check_branch
        %1631 = sbr.rel (%p1629) target = $region84
      $region83: #{tpu_custom_call.1} parent=5 // pred_region
        %s1632 = ssub.s32 %s23, 2
        // Predicated region
        $region85: #{tpu_custom_call.1} parent=83 // pred_check
          %p1633 = pneg %p309
        $region86: #{tpu_custom_call.1} parent=83 // pred_check_branch
          %1635 = sbr.rel (%p1633) target = $region88
        $region87: #{tpu_custom_call.1} parent=83 // pred_region
          %s1636 = sand.u32 %s294, 1
          %s1637 = scalar_lea.sflag [#allocation4], %s1636
          %s1638 = sand.u32 %s294, 1
          %s1639 = smul.addr %s1638, 16
          %s1640 = scalar_lea.vmem [#allocation7], %s1639
          %1641 = dma.done %s1637, 256
        $region88: #{tpu_custom_call.1} parent=83 // pred_fallthru
          _
      $region84: #{tpu_custom_call.1} parent=5 // pred_fallthru
        _
    $region6: #{tpu_custom_call.1} parent=1 // loop_footer
      %s27 = sadd.s32 1, %s23
    $region7: #{tpu_custom_call.1} parent=1 // loop_footer_branch
      %22 = sbr.rel target = $region3
    $region8: #{tpu_custom_call.1} parent=1 // loop_exit
      _
    %1642 = vsyncpa [#allocation3], 1
    %s1643 = scalar_lea.sflag [#allocation3], 1
    %1644 = vsyncpa %s1643, 1
    %1645 = vsyncpa [#allocation6], 1
    %1646 = vsyncpa [#allocation4], 1
    %s1647 = scalar_lea.sflag [#allocation4], 1
    %1648 = vsyncpa %s1647, 1

</llo_original>
